<compile_context>
chip_gen: v7x
topology: tpu7x:2x2x1
jax: 0.10.0
libtpu: 0.0.40
codegen_flags: <defaults>
</compile_context>

<pallas_src>
import functools

import jax
import jax.numpy as jnp
from jax import lax
from jax.experimental import pallas as pl
from jax.experimental.pallas import tpu as pltpu


_VMEM_LIMIT = 32 * 1024 * 1024   # safe scoped-VMEM cap on v5e / v6e / v7x
_LANE = 128


def _round_up(x, m):
    return ((x + m - 1) // m) * m


def _pick_tile(n, pref):
    """Largest clean tile: `pref` if it divides n, else the full dimension."""
    return pref if n % pref == 0 else n


# ---------------------------------------------------------------------------
# Tiled matmul kernel (bf16 operands, f32 accumulation).  Used for the radius
# hop chain (A @ z) and for the pm_pd fuse matmul; `transpose_lhs` contracts
# over pm_pd's first axis so no XLA-side transpose is ever materialized.
# ---------------------------------------------------------------------------
def _matmul_kernel(a_ref, b_ref, o_ref, acc_ref, *, transpose_lhs):
    @pl.when(pl.program_id(1) == 0)
    def _():
        acc_ref[...] = jnp.zeros_like(acc_ref)

    if transpose_lhs:
        # a block: [tk, tm]; contract over axis 0 — the MXU consumes it directly.
        acc_ref[...] += lax.dot_general(
            a_ref[...], b_ref[...],
            dimension_numbers=(((0,), (0,)), ((), ())),
            preferred_element_type=jnp.float32)
    else:
        acc_ref[...] += jnp.dot(a_ref[...], b_ref[...],
                                preferred_element_type=jnp.float32)

    @pl.when(pl.program_id(1) == pl.num_programs(1) - 1)
    def _():
        o_ref[...] = acc_ref[...].astype(o_ref.dtype)


def _tiled_matmul(a, b, *, transpose_lhs=False, out_dtype=jnp.bfloat16,
                  tm=256, tk=512):
    if transpose_lhs:
        k_dim, m_dim = a.shape
    else:
        m_dim, k_dim = a.shape
    kb, f_dim = b.shape
    assert kb == k_dim
    tm = _pick_tile(m_dim, tm)
    tk = _pick_tile(k_dim, tk)
    grid = (m_dim // tm, k_dim // tk)

    if transpose_lhs:
        a_spec = pl.BlockSpec((tk, tm), lambda i, k: (k, i))
    else:
        a_spec = pl.BlockSpec((tm, tk), lambda i, k: (i, k))

    return pl.pallas_call(
        functools.partial(_matmul_kernel, transpose_lhs=transpose_lhs),
        out_shape=jax.ShapeDtypeStruct((m_dim, f_dim), out_dtype),
        grid_spec=pltpu.PrefetchScalarGridSpec(
            num_scalar_prefetch=0,
            grid=grid,
            in_specs=[a_spec,
                      pl.BlockSpec((tk, f_dim), lambda i, k: (k, 0))],
            out_specs=pl.BlockSpec((tm, f_dim), lambda i, k: (i, 0)),
            scratch_shapes=[pltpu.VMEM((tm, f_dim), jnp.float32)]),
        compiler_params=pltpu.CompilerParams(
            dimension_semantics=("parallel", "arbitrary"),
            vmem_limit_bytes=_VMEM_LIMIT),
    )(a, b)


# ---------------------------------------------------------------------------
# Fused projection (single MXU matmul against concatenated weights) +
# half-ReLU + BatchNorm statistics (phase 1 of the two-phase BN).
# ---------------------------------------------------------------------------
def _proj_stats_kernel(acts_ref, w_ref, b_ref, y_ref, sum_ref, ssq_ref, *,
                       n_half):
    y = jnp.dot(acts_ref[...], w_ref[...],
                preferred_element_type=jnp.float32) + b_ref[...]
    # result = cat([y[:, :n], relu(y[:, n:])], dim=1)
    col = lax.broadcasted_iota(jnp.int32, y.shape, 1)
    y = jnp.where(col < n_half, y, jnp.maximum(y, 0.0))
    y_ref[...] = y

    @pl.when(pl.program_id(0) == 0)
    def _():
        sum_ref[...] = jnp.zeros_like(sum_ref)
        ssq_ref[...] = jnp.zeros_like(ssq_ref)
    sum_ref[...] += jnp.sum(y, axis=0, keepdims=True)
    ssq_ref[...] += jnp.sum(y * y, axis=0, keepdims=True)


# BatchNorm phase 2: normalize each row tile with the global batch statistics.
def _bn_apply_kernel(y_ref, sum_ref, ssq_ref, gamma_ref, beta_ref, o_ref, *,
                     inv_n, eps):
    mean = sum_ref[...] * inv_n
    var = jnp.maximum(ssq_ref[...] * inv_n - mean * mean, 0.0)
    o_ref[...] = ((y_ref[...] - mean) * lax.rsqrt(var + eps) * gamma_ref[...]
                  + beta_ref[...]).astype(o_ref.dtype)


# ---------------------------------------------------------------------------
# LGNNCore forward
# ---------------------------------------------------------------------------
def _prep_core_params(params, out_pad):
    radius = params["w_rad"].shape[0]
    # Weight order must match the activation concat order:
    #   [fa, deg*fa, A@fa, A^2@fa, ..., pm_pd@fb]
    w_cat = jnp.concatenate(
        [params["w_prev"], params["w_deg"]]
        + [params["w_rad"][i] for i in range(radius)]
        + [params["w_fuse"]], axis=0)
    b_cat = (params["b_prev"] + params["b_deg"]
             + jnp.sum(params["b_rad"], axis=0) + params["b_fuse"])
    out_feats = w_cat.shape[1]
    pad = out_pad - out_feats
    w_cat = jnp.pad(w_cat, ((0, 0), (0, pad))).astype(jnp.bfloat16)
    b_cat = jnp.pad(b_cat, ((0, 0), (0, pad)))
    gamma = jnp.pad(params["gamma"], ((0, 0), (0, pad)), constant_values=1.0)
    beta = jnp.pad(params["beta"], ((0, 0), (0, pad)))
    return w_cat, b_cat, gamma, beta


def lgnn_core(adj, feat_a, feat_b, deg, pm_pd, params, radius, *,
              transpose_pm_pd=False):
    n, in_feats = feat_a.shape
    out_feats = params["w_prev"].shape[1]
    out_pad = _round_up(out_feats, _LANE)

    adj_bf = adj.astype(jnp.bfloat16)      # 0/1 adjacency -> exact in bf16
    fa_bf = feat_a.astype(jnp.bfloat16)
    fb_bf = feat_b.astype(jnp.bfloat16)
    pm_bf = pm_pd.astype(jnp.bfloat16)

    # --- radius hop chain: A^1, A^2, ..., A^(2^(radius-1)) @ feat_a ---------
    # TODO(synk): for large graphs where bf16 A fits VMEM, keep A resident
    # across all 2^(radius-1) hops (manual pipeline) instead of re-streaming.
    hops = []
    z = _tiled_matmul(adj_bf, fa_bf)
    hops.append(z)
    for i in range(radius - 1):
        for _ in range(2 ** i):
            z = _tiled_matmul(adj_bf, z)
        hops.append(z)

    # --- fuse input: pm_pd @ feat_b  (or pm_pd^T @ feat_b, contracted
    #     over the first axis in-kernel — no XLA transpose pass) -------------
    fuse_in = _tiled_matmul(pm_bf, fb_bf, transpose_lhs=transpose_pm_pd)

    # --- single fused projection over concatenated activations --------------
    acts = jnp.concatenate(
        [fa_bf, (deg * feat_a).astype(jnp.bfloat16)] + hops + [fuse_in], axis=1)
    w_cat, b_cat, gamma, beta = _prep_core_params(params, out_pad)

    tm = _pick_tile(n, 256)
    grid = (n // tm,)
    k_cat = acts.shape[1]

    y_pre, ysum, yssq = pl.pallas_call(
        functools.partial(_proj_stats_kernel, n_half=out_feats // 2),
        out_shape=(jax.ShapeDtypeStruct((n, out_pad), jnp.float32),
                   jax.ShapeDtypeStruct((1, out_pad), jnp.float32),
                   jax.ShapeDtypeStruct((1, out_pad), jnp.float32)),
        grid_spec=pltpu.PrefetchScalarGridSpec(
            num_scalar_prefetch=0,
            grid=grid,
            in_specs=[pl.BlockSpec((tm, k_cat), lambda i: (i, 0)),
                      pl.BlockSpec((k_cat, out_pad), lambda i: (0, 0)),
                      pl.BlockSpec((1, out_pad), lambda i: (0, 0))],
            out_specs=(pl.BlockSpec((tm, out_pad), lambda i: (i, 0)),
                       pl.BlockSpec((1, out_pad), lambda i: (0, 0)),
                       pl.BlockSpec((1, out_pad), lambda i: (0, 0)))),
        compiler_params=pltpu.CompilerParams(
            dimension_semantics=("arbitrary",),
            vmem_limit_bytes=_VMEM_LIMIT),
    )(acts, w_cat, b_cat)

    y = pl.pallas_call(
        functools.partial(_bn_apply_kernel, inv_n=1.0 / n, eps=1e-5),
        out_shape=jax.ShapeDtypeStruct((n, out_pad), jnp.float32),
        grid_spec=pltpu.PrefetchScalarGridSpec(
            num_scalar_prefetch=0,
            grid=grid,
            in_specs=[pl.BlockSpec((tm, out_pad), lambda i: (i, 0)),
                      pl.BlockSpec((1, out_pad), lambda i: (0, 0)),
                      pl.BlockSpec((1, out_pad), lambda i: (0, 0)),
                      pl.BlockSpec((1, out_pad), lambda i: (0, 0)),
                      pl.BlockSpec((1, out_pad), lambda i: (0, 0))],
            out_specs=pl.BlockSpec((tm, out_pad), lambda i: (i, 0))),
        compiler_params=pltpu.CompilerParams(
            dimension_semantics=("parallel",),
            vmem_limit_bytes=_VMEM_LIMIT),
    )(y_pre, ysum, yssq, gamma, beta)

    return y[:, :out_feats]


def lgnn_layer(g_adj, lg_adj, x, lg_x, deg_g, deg_lg, pm_pd,
               g_params, lg_params, radius):
    """LGNNLayer.forward: returns (next_x, next_lg_x)."""
    # TODO(synk): on v7x (2 TensorCores/chip) the two independent cores below
    # could run concurrently via a size-2 "parallel" grid axis / core_map.
    next_x = lgnn_core(g_adj, x, lg_x, deg_g, pm_pd, g_params, radius,
                       transpose_pm_pd=False)
    next_lg_x = lgnn_core(lg_adj, lg_x, x, deg_lg, pm_pd, lg_params, radius,
                          transpose_pm_pd=True)
    return next_x, next_lg_x


# ---------------------------------------------------------------------------
# Deterministic parameter init (shapes match LGNNCore.__init__)
# ---------------------------------------------------------------------------
def init_core_params(key, in_feats, out_feats, radius):
    def lin(k):
        kw, kb = jax.random.split(k)
        bound = 1.0 / jnp.sqrt(jnp.float32(in_feats))
        w = jax.random.uniform(kw, (in_feats, out_feats), jnp.float32, -bound, bound)
        b = jax.random.uniform(kb, (1, out_feats), jnp.float32, -bound, bound)
        return w, b

    keys = jax.random.split(key, 4 + radius)
    w_prev, b_prev = lin(keys[0])
    w_deg, b_deg = lin(keys[1])
    w_fuse, b_fuse = lin(keys[2])
    rad = [lin(keys[3 + i]) for i in range(radius)]
    w_rad = jnp.stack([w for w, _ in rad], axis=0)          # [radius, in, out]
    b_rad = jnp.stack([b for _, b in rad], axis=0)          # [radius, 1, out]

    return {
        "w_prev": w_prev, "b_prev": b_prev,
        "w_deg": w_deg, "b_deg": b_deg,
        "w_rad": w_rad, "b_rad": b_rad,
        "w_fuse": w_fuse, "b_fuse": b_fuse,
        "gamma": jnp.ones((1, out_feats), jnp.float32),      # BatchNorm1d weight
        "beta": jnp.zeros((1, out_feats), jnp.float32),      # BatchNorm1d bias
    }


# Pure-JAX f32 reference (mirrors the PyTorch LGNNCore forward) for sanity check.
def _lgnn_core_ref(adj, fa, fb, deg, pm_pd, params, radius, transpose_pm_pd):
    def lin(xx, w, b):
        return xx @ w + b
    prev = lin(fa, params["w_prev"], params["b_prev"])
    degp = lin(deg * fa, params["w_deg"], params["b_deg"])
    z = adj @ fa
    rad = lin(z, params["w_rad"][0], params["b_rad"][0])
    for i in range(radius - 1):
        for _ in range(2 ** i):
            z = adj @ z
        rad = rad + lin(z, params["w_rad"][i + 1], params["b_rad"][i + 1])
    p = pm_pd.T if transpose_pm_pd else pm_pd
    fuse = lin(p @ fb, params["w_fuse"], params["b_fuse"])
    res = prev + degp + rad + fuse
    nh = params["w_prev"].shape[1] // 2
    res = jnp.concatenate([res[:, :nh], jnp.maximum(res[:, nh:], 0.0)], axis=1)
    mean = jnp.mean(res, axis=0, keepdims=True)
    var = jnp.mean((res - mean) ** 2, axis=0, keepdims=True)
    res = (res - mean) * lax.rsqrt(var + 1e-5)
    return res * params["gamma"] + params["beta"]


if __name__ == "__main__":
    in_feats, out_feats, radius = 8, 16, 2
    n_g, n_lg = 16, 32           # graph nodes / line-graph nodes (edges)

    key = jax.random.PRNGKey(0)
    k_adj_g, k_adj_lg, k_pm, k_x, k_lgx, k_pg, k_plg = jax.random.split(key, 7)

    # Dense aggregation matrices standing in for g / lg message passing.
    g_adj = (jax.random.uniform(k_adj_g, (n_g, n_g)) < 0.3).astype(jnp.float32)
    g_adj = g_adj * (1.0 - jnp.eye(n_g, dtype=jnp.float32))
    lg_adj = (jax.random.uniform(k_adj_lg, (n_lg, n_lg)) < 0.2).astype(jnp.float32)
    lg_adj = lg_adj * (1.0 - jnp.eye(n_lg, dtype=jnp.float32))

    pm_pd = (jax.random.uniform(k_pm, (n_g, n_lg)) < 0.25).astype(jnp.float32)

    x = jax.random.normal(k_x, (n_g, in_feats), jnp.float32)
    lg_x = jax.random.normal(k_lgx, (n_lg, in_feats), jnp.float32)

    deg_g = jnp.sum(g_adj, axis=1, keepdims=True)            # [N_g, 1]
    deg_lg = jnp.sum(lg_adj, axis=1, keepdims=True)          # [N_lg, 1]

    g_params = init_core_params(k_pg, in_feats, out_feats, radius)
    lg_params = init_core_params(k_plg, in_feats, out_feats, radius)

    layer = jax.jit(lgnn_layer, static_argnames=("radius",))
    next_x, next_lg_x = layer(g_adj, lg_adj, x, lg_x, deg_g, deg_lg, pm_pd,
                              g_params, lg_params, radius=radius)
    jax.block_until_ready((next_x, next_lg_x))

    assert next_x.shape == (n_g, out_feats)
    assert next_lg_x.shape == (n_lg, out_feats)
    assert bool(jnp.all(jnp.isfinite(next_x)))
    assert bool(jnp.all(jnp.isfinite(next_lg_x)))

    # Loose comparison against the f32 reference (kernel runs the MXU in bf16).
    ref_x = _lgnn_core_ref(g_adj, x, lg_x, deg_g, pm_pd, g_params, radius, False)
    ref_lg = _lgnn_core_ref(lg_adj, lg_x, x, deg_lg, pm_pd, lg_params, radius, True)
    assert float(jnp.max(jnp.abs(next_x - ref_x))) < 0.5
    assert float(jnp.max(jnp.abs(next_lg_x - ref_lg))) < 0.5

    print("KERNEL_OK")
</pallas_src>

<mosaic_0001>
module attributes {stable_mosaic.version = 11 : i64} {
  func.func @_matmul_kernel(%arg0: i32, %arg1: i32, %arg2: memref<16x16xbf16, #tpu.memory_space<vmem>>, %arg3: memref<16x8xbf16, #tpu.memory_space<vmem>>, %arg4: memref<16x8xbf16, #tpu.memory_space<vmem>>, %arg5: memref<16x8xf32, #tpu.memory_space<vmem>>) attributes {dimension_semantics = [#tpu.dimension_semantics<parallel>, #tpu.dimension_semantics<arbitrary>], iteration_bounds = array<i64: 1, 1>, scalar_prefetch = 0 : i64, scratch_operands = 1 : i64, tpu.core_type = #tpu.core_type<tc>, window_params = [{transform_indices = @transform_0, window_bounds = array<i64: 16, 16>}, {transform_indices = @transform_1, window_bounds = array<i64: 16, 8>}, {transform_indices = @transform_2, window_bounds = array<i64: 16, 8>}]} {
    %c0_i32 = arith.constant 0 : i32
    %0 = arith.cmpi eq, %arg1, %c0_i32 : i32
    %1 = arith.extui %0 : i1 to i32
    %c0_i32_0 = arith.constant 0 : i32
    %2 = arith.cmpi ne, %1, %c0_i32_0 : i32
    scf.if %2 {
      %cst_10 = arith.constant 0.000000e+00 : f32
      %12 = vector.broadcast %cst_10 : f32 to vector<16x8xf32>
      %c0_11 = arith.constant 0 : index
      %c0_12 = arith.constant 0 : index
      %13 = vector.load %arg5[%c0_11, %c0_12] : memref<16x8xf32, #tpu.memory_space<vmem>>, vector<16x8xf32>
      tpu.vector_store %arg5[%c0_11, %c0_12], %12 {strides = array<i32>} : memref<16x8xf32, #tpu.memory_space<vmem>>, vector<16x8xf32>,
    } else {
    }
    %c0 = arith.constant 0 : index
    %c0_1 = arith.constant 0 : index
    %3 = vector.load %arg5[%c0, %c0_1] : memref<16x8xf32, #tpu.memory_space<vmem>>, vector<16x8xf32>
    %c0_2 = arith.constant 0 : index
    %c0_3 = arith.constant 0 : index
    %4 = vector.load %arg2[%c0_2, %c0_3] : memref<16x16xbf16, #tpu.memory_space<vmem>>, vector<16x16xbf16>
    %c0_4 = arith.constant 0 : index
    %c0_5 = arith.constant 0 : index
    %5 = vector.load %arg3[%c0_4, %c0_5] : memref<16x8xbf16, #tpu.memory_space<vmem>>, vector<16x8xbf16>
    %cst = arith.constant dense<0.000000e+00> : vector<16x8xf32>
    %6 = tpu.matmul %4, %5, %cst {dimension_numbers = #tpu.dot_dimension_numbers<[1], [0], [0], [1], [0, 0, 1, 1], [], []>} : vector<16x16xbf16>, vector<16x8xbf16>, vector<16x8xf32> -> vector<16x8xf32>
    %7 = arith.addf %3, %6 : vector<16x8xf32>
    %c0_6 = arith.constant 0 : index
    %c0_7 = arith.constant 0 : index
    %8 = vector.load %arg5[%c0_6, %c0_7] : memref<16x8xf32, #tpu.memory_space<vmem>>, vector<16x8xf32>
    tpu.vector_store %arg5[%c0_6, %c0_7], %7 {strides = array<i32>} : memref<16x8xf32, #tpu.memory_space<vmem>>, vector<16x8xf32>,
    %c0_i32_8 = arith.constant 0 : i32
    %9 = arith.cmpi eq, %arg1, %c0_i32_8 : i32
    %10 = arith.extui %9 : i1 to i32
    %c0_i32_9 = arith.constant 0 : i32
    %11 = arith.cmpi ne, %10, %c0_i32_9 : i32
    scf.if %11 {
      %c0_10 = arith.constant 0 : index
      %c0_11 = arith.constant 0 : index
      %12 = vector.load %arg5[%c0_10, %c0_11] : memref<16x8xf32, #tpu.memory_space<vmem>>, vector<16x8xf32>
      %13 = arith.truncf %12 : vector<16x8xf32> to vector<16x8xbf16>
      %c0_12 = arith.constant 0 : index
      %c0_13 = arith.constant 0 : index
      %14 = vector.load %arg4[%c0_12, %c0_13] : memref<16x8xbf16, #tpu.memory_space<vmem>>, vector<16x8xbf16>
      tpu.vector_store %arg4[%c0_12, %c0_13], %13 {strides = array<i32>} : memref<16x8xbf16, #tpu.memory_space<vmem>>, vector<16x8xbf16>,
    } else {
    }
    return
  }
  func.func @transform_0(%arg0: i32, %arg1: i32) -> (i32, i32) {
    %c0_i32 = arith.constant 0 : i32
    return %arg0, %arg1 : i32, i32
  }
  func.func @transform_1(%arg0: i32, %arg1: i32) -> (i32, i32) {
    %c0_i32 = arith.constant 0 : i32
    %c0_i32_0 = arith.constant 0 : i32
    return %arg1, %c0_i32 : i32, i32
  }
  func.func @transform_2(%arg0: i32, %arg1: i32) -> (i32, i32) {
    %c0_i32 = arith.constant 0 : i32
    %c0_i32_0 = arith.constant 0 : i32
    return %arg0, %c0_i32 : i32, i32
  }
}

module attributes {stable_mosaic.version = 11 : i64} {
  func.func @_matmul_kernel(%arg0: i32, %arg1: i32, %arg2: memref<16x32xbf16, #tpu.memory_space<vmem>>, %arg3: memref<32x8xbf16, #tpu.memory_space<vmem>>, %arg4: memref<16x8xbf16, #tpu.memory_space<vmem>>, %arg5: memref<16x8xf32, #tpu.memory_space<vmem>>) attributes {dimension_semantics = [#tpu.dimension_semantics<parallel>, #tpu.dimension_semantics<arbitrary>], iteration_bounds = array<i64: 1, 1>, scalar_prefetch = 0 : i64, scratch_operands = 1 : i64, tpu.core_type = #tpu.core_type<tc>, window_params = [{transform_indices = @transform_0, window_bounds = array<i64: 16, 32>}, {transform_indices = @transform_1, window_bounds = array<i64: 32, 8>}, {transform_indices = @transform_2, window_bounds = array<i64: 16, 8>}]} {
    %c0_i32 = arith.constant 0 : i32
    %0 = arith.cmpi eq, %arg1, %c0_i32 : i32
    %1 = arith.extui %0 : i1 to i32
    %c0_i32_0 = arith.constant 0 : i32
    %2 = arith.cmpi ne, %1, %c0_i32_0 : i32
    scf.if %2 {
      %cst_10 = arith.constant 0.000000e+00 : f32
      %12 = vector.broadcast %cst_10 : f32 to vector<16x8xf32>
      %c0_11 = arith.constant 0 : index
      %c0_12 = arith.constant 0 : index
      %13 = vector.load %arg5[%c0_11, %c0_12] : memref<16x8xf32, #tpu.memory_space<vmem>>, vector<16x8xf32>
      tpu.vector_store %arg5[%c0_11, %c0_12], %12 {strides = array<i32>} : memref<16x8xf32, #tpu.memory_space<vmem>>, vector<16x8xf32>,
    } else {
    }
    %c0 = arith.constant 0 : index
    %c0_1 = arith.constant 0 : index
    %3 = vector.load %arg5[%c0, %c0_1] : memref<16x8xf32, #tpu.memory_space<vmem>>, vector<16x8xf32>
    %c0_2 = arith.constant 0 : index
    %c0_3 = arith.constant 0 : index
    %4 = vector.load %arg2[%c0_2, %c0_3] : memref<16x32xbf16, #tpu.memory_space<vmem>>, vector<16x32xbf16>
    %c0_4 = arith.constant 0 : index
    %c0_5 = arith.constant 0 : index
    %5 = vector.load %arg3[%c0_4, %c0_5] : memref<32x8xbf16, #tpu.memory_space<vmem>>, vector<32x8xbf16>
    %cst = arith.constant dense<0.000000e+00> : vector<16x8xf32>
    %6 = tpu.matmul %4, %5, %cst {dimension_numbers = #tpu.dot_dimension_numbers<[1], [0], [0], [1], [0, 0, 1, 1], [], []>} : vector<16x32xbf16>, vector<32x8xbf16>, vector<16x8xf32> -> vector<16x8xf32>
    %7 = arith.addf %3, %6 : vector<16x8xf32>
    %c0_6 = arith.constant 0 : index
    %c0_7 = arith.constant 0 : index
    %8 = vector.load %arg5[%c0_6, %c0_7] : memref<16x8xf32, #tpu.memory_space<vmem>>, vector<16x8xf32>
    tpu.vector_store %arg5[%c0_6, %c0_7], %7 {strides = array<i32>} : memref<16x8xf32, #tpu.memory_space<vmem>>, vector<16x8xf32>,
    %c0_i32_8 = arith.constant 0 : i32
    %9 = arith.cmpi eq, %arg1, %c0_i32_8 : i32
    %10 = arith.extui %9 : i1 to i32
    %c0_i32_9 = arith.constant 0 : i32
    %11 = arith.cmpi ne, %10, %c0_i32_9 : i32
    scf.if %11 {
      %c0_10 = arith.constant 0 : index
      %c0_11 = arith.constant 0 : index
      %12 = vector.load %arg5[%c0_10, %c0_11] : memref<16x8xf32, #tpu.memory_space<vmem>>, vector<16x8xf32>
      %13 = arith.truncf %12 : vector<16x8xf32> to vector<16x8xbf16>
      %c0_12 = arith.constant 0 : index
      %c0_13 = arith.constant 0 : index
      %14 = vector.load %arg4[%c0_12, %c0_13] : memref<16x8xbf16, #tpu.memory_space<vmem>>, vector<16x8xbf16>
      tpu.vector_store %arg4[%c0_12, %c0_13], %13 {strides = array<i32>} : memref<16x8xbf16, #tpu.memory_space<vmem>>, vector<16x8xbf16>,
    } else {
    }
    return
  }
  func.func @transform_0(%arg0: i32, %arg1: i32) -> (i32, i32) {
    %c0_i32 = arith.constant 0 : i32
    return %arg0, %arg1 : i32, i32
  }
  func.func @transform_1(%arg0: i32, %arg1: i32) -> (i32, i32) {
    %c0_i32 = arith.constant 0 : i32
    %c0_i32_0 = arith.constant 0 : i32
    return %arg1, %c0_i32 : i32, i32
  }
  func.func @transform_2(%arg0: i32, %arg1: i32) -> (i32, i32) {
    %c0_i32 = arith.constant 0 : i32
    %c0_i32_0 = arith.constant 0 : i32
    return %arg0, %c0_i32 : i32, i32
  }
}

module attributes {stable_mosaic.version = 11 : i64} {
  func.func @_proj_stats_kernel(%arg0: i32, %arg1: memref<16x40xbf16, #tpu.memory_space<vmem>>, %arg2: memref<40x128xbf16, #tpu.memory_space<vmem>>, %arg3: memref<1x128xf32, #tpu.memory_space<vmem>>, %arg4: memref<16x128xf32, #tpu.memory_space<vmem>>, %arg5: memref<1x128xf32, #tpu.memory_space<vmem>>, %arg6: memref<1x128xf32, #tpu.memory_space<vmem>>) attributes {dimension_semantics = [#tpu.dimension_semantics<arbitrary>], iteration_bounds = array<i64: 1>, scalar_prefetch = 0 : i64, scratch_operands = 0 : i64, tpu.core_type = #tpu.core_type<tc>, window_params = [{transform_indices = @transform_0, window_bounds = array<i64: 16, 40>}, {pipeline_mode = #tpu.pipeline_mode<synchronous>, transform_indices = @transform_1, window_bounds = array<i64: 40, 128>}, {pipeline_mode = #tpu.pipeline_mode<synchronous>, transform_indices = @transform_2, window_bounds = array<i64: 1, 128>}, {transform_indices = @transform_3, window_bounds = array<i64: 16, 128>}, {pipeline_mode = #tpu.pipeline_mode<synchronous>, transform_indices = @transform_4, window_bounds = array<i64: 1, 128>}, {pipeline_mode = #tpu.pipeline_mode<synchronous>, transform_indices = @transform_5, window_bounds = array<i64: 1, 128>}]} {
    %c0 = arith.constant 0 : index
    %c0_0 = arith.constant 0 : index
    %0 = vector.load %arg1[%c0, %c0_0] : memref<16x40xbf16, #tpu.memory_space<vmem>>, vector<16x40xbf16>
    %c0_1 = arith.constant 0 : index
    %c0_2 = arith.constant 0 : index
    %1 = vector.load %arg2[%c0_1, %c0_2] : memref<40x128xbf16, #tpu.memory_space<vmem>>, vector<40x128xbf16>
    %cst = arith.constant dense<0.000000e+00> : vector<16x128xf32>
    %2 = tpu.matmul %0, %1, %cst {dimension_numbers = #tpu.dot_dimension_numbers<[1], [0], [0], [1], [0, 0, 1, 1], [], []>} : vector<16x40xbf16>, vector<40x128xbf16>, vector<16x128xf32> -> vector<16x128xf32>
    %c0_3 = arith.constant 0 : index
    %c0_4 = arith.constant 0 : index
    %3 = vector.load %arg3[%c0_3, %c0_4] : memref<1x128xf32, #tpu.memory_space<vmem>>, vector<1x128xf32>
    %4 = vector.broadcast %3 : vector<1x128xf32> to vector<16x128xf32>
    %5 = arith.addf %2, %4 : vector<16x128xf32>
    %6 = tpu.iota {dimensions = array<i32: 1>} : vector<16x128xi32>
    %c8_i32 = arith.constant 8 : i32
    %7 = vector.broadcast %c8_i32 : i32 to vector<16x128xi32>
    %8 = arith.cmpi slt, %6, %7 : vector<16x128xi32>
    %cst_5 = arith.constant 0.000000e+00 : f32
    %9 = vector.broadcast %cst_5 : f32 to vector<16x128xf32>
    %10 = arith.maximumf %5, %9 : vector<16x128xf32>
    %11 = arith.select %8, %5, %10 : vector<16x128xi1>, vector<16x128xf32>
    %c0_6 = arith.constant 0 : index
    %c0_7 = arith.constant 0 : index
    %12 = vector.load %arg4[%c0_6, %c0_7] : memref<16x128xf32, #tpu.memory_space<vmem>>, vector<16x128xf32>
    tpu.vector_store %arg4[%c0_6, %c0_7], %11 {strides = array<i32>} : memref<16x128xf32, #tpu.memory_space<vmem>>, vector<16x128xf32>,
    %c0_i32 = arith.constant 0 : i32
    %13 = arith.cmpi eq, %arg0, %c0_i32 : i32
    %14 = arith.extui %13 : i1 to i32
    %c0_i32_8 = arith.constant 0 : i32
    %15 = arith.cmpi ne, %14, %c0_i32_8 : i32
    scf.if %15 {
      %cst_19 = arith.constant 0.000000e+00 : f32
      %27 = vector.broadcast %cst_19 : f32 to vector<1x128xf32>
      %c0_20 = arith.constant 0 : index
      %c0_21 = arith.constant 0 : index
      %28 = vector.load %arg5[%c0_20, %c0_21] : memref<1x128xf32, #tpu.memory_space<vmem>>, vector<1x128xf32>
      tpu.vector_store %arg5[%c0_20, %c0_21], %27 {strides = array<i32>} : memref<1x128xf32, #tpu.memory_space<vmem>>, vector<1x128xf32>,
      %cst_22 = arith.constant 0.000000e+00 : f32
      %29 = vector.broadcast %cst_22 : f32 to vector<1x128xf32>
      %c0_23 = arith.constant 0 : index
      %c0_24 = arith.constant 0 : index
      %30 = vector.load %arg6[%c0_23, %c0_24] : memref<1x128xf32, #tpu.memory_space<vmem>>, vector<1x128xf32>
      tpu.vector_store %arg6[%c0_23, %c0_24], %29 {strides = array<i32>} : memref<1x128xf32, #tpu.memory_space<vmem>>, vector<1x128xf32>,
    } else {
    }
    %c0_9 = arith.constant 0 : index
    %c0_10 = arith.constant 0 : index
    %16 = vector.load %arg5[%c0_9, %c0_10] : memref<1x128xf32, #tpu.memory_space<vmem>>, vector<1x128xf32>
    %cst_11 = arith.constant dense<0.000000e+00> : vector<128xf32>
    %17 = vector.multi_reduction <add>, %11, %cst_11 [0] : vector<16x128xf32> to vector<128xf32>
    %18 = vector.shape_cast %17 : vector<128xf32> to vector<1x128xf32>
    %19 = arith.addf %16, %18 : vector<1x128xf32>
    %c0_12 = arith.constant 0 : index
    %c0_13 = arith.constant 0 : index
    %20 = vector.load %arg5[%c0_12, %c0_13] : memref<1x128xf32, #tpu.memory_space<vmem>>, vector<1x128xf32>
    tpu.vector_store %arg5[%c0_12, %c0_13], %19 {strides = array<i32>} : memref<1x128xf32, #tpu.memory_space<vmem>>, vector<1x128xf32>,
    %c0_14 = arith.constant 0 : index
    %c0_15 = arith.constant 0 : index
    %21 = vector.load %arg6[%c0_14, %c0_15] : memref<1x128xf32, #tpu.memory_space<vmem>>, vector<1x128xf32>
    %22 = arith.mulf %11, %11 : vector<16x128xf32>
    %cst_16 = arith.constant dense<0.000000e+00> : vector<128xf32>
    %23 = vector.multi_reduction <add>, %22, %cst_16 [0] : vector<16x128xf32> to vector<128xf32>
    %24 = vector.shape_cast %23 : vector<128xf32> to vector<1x128xf32>
    %25 = arith.addf %21, %24 : vector<1x128xf32>
    %c0_17 = arith.constant 0 : index
    %c0_18 = arith.constant 0 : index
    %26 = vector.load %arg6[%c0_17, %c0_18] : memref<1x128xf32, #tpu.memory_space<vmem>>, vector<1x128xf32>
    tpu.vector_store %arg6[%c0_17, %c0_18], %25 {strides = array<i32>} : memref<1x128xf32, #tpu.memory_space<vmem>>, vector<1x128xf32>,
    return
  }
  func.func @transform_0(%arg0: i32) -> (i32, i32) {
    %c0_i32 = arith.constant 0 : i32
    %c0_i32_0 = arith.constant 0 : i32
    return %arg0, %c0_i32 : i32, i32
  }
  func.func @transform_1(%arg0: i32) -> (i32, i32) {
    %c0_i32 = arith.constant 0 : i32
    %c0_i32_0 = arith.constant 0 : i32
    %c0_i32_1 = arith.constant 0 : i32
    return %c0_i32, %c0_i32_0 : i32, i32
  }
  func.func @transform_2(%arg0: i32) -> (i32, i32) {
    %c0_i32 = arith.constant 0 : i32
    %c0_i32_0 = arith.constant 0 : i32
    %c0_i32_1 = arith.constant 0 : i32
    return %c0_i32, %c0_i32_0 : i32, i32
  }
  func.func @transform_3(%arg0: i32) -> (i32, i32) {
    %c0_i32 = arith.constant 0 : i32
    %c0_i32_0 = arith.constant 0 : i32
    return %arg0, %c0_i32 : i32, i32
  }
  func.func @transform_4(%arg0: i32) -> (i32, i32) {
    %c0_i32 = arith.constant 0 : i32
    %c0_i32_0 = arith.constant 0 : i32
    %c0_i32_1 = arith.constant 0 : i32
    return %c0_i32, %c0_i32_0 : i32, i32
  }
  func.func @transform_5(%arg0: i32) -> (i32, i32) {
    %c0_i32 = arith.constant 0 : i32
    %c0_i32_0 = arith.constant 0 : i32
    %c0_i32_1 = arith.constant 0 : i32
    return %c0_i32, %c0_i32_0 : i32, i32
  }
}

module attributes {stable_mosaic.version = 11 : i64} {
  func.func @_bn_apply_kernel(%arg0: i32, %arg1: memref<16x128xf32, #tpu.memory_space<vmem>>, %arg2: memref<1x128xf32, #tpu.memory_space<vmem>>, %arg3: memref<1x128xf32, #tpu.memory_space<vmem>>, %arg4: memref<1x128xf32, #tpu.memory_space<vmem>>, %arg5: memref<1x128xf32, #tpu.memory_space<vmem>>, %arg6: memref<16x128xf32, #tpu.memory_space<vmem>>) attributes {dimension_semantics = [#tpu.dimension_semantics<parallel>], iteration_bounds = array<i64: 1>, scalar_prefetch = 0 : i64, scratch_operands = 0 : i64, tpu.core_type = #tpu.core_type<tc>, window_params = [{transform_indices = @transform_0, window_bounds = array<i64: 16, 128>}, {pipeline_mode = #tpu.pipeline_mode<synchronous>, transform_indices = @transform_1, window_bounds = array<i64: 1, 128>}, {pipeline_mode = #tpu.pipeline_mode<synchronous>, transform_indices = @transform_2, window_bounds = array<i64: 1, 128>}, {pipeline_mode = #tpu.pipeline_mode<synchronous>, transform_indices = @transform_3, window_bounds = array<i64: 1, 128>}, {pipeline_mode = #tpu.pipeline_mode<synchronous>, transform_indices = @transform_4, window_bounds = array<i64: 1, 128>}, {transform_indices = @transform_5, window_bounds = array<i64: 16, 128>}]} {
    %c0 = arith.constant 0 : index
    %c0_0 = arith.constant 0 : index
    %0 = vector.load %arg2[%c0, %c0_0] : memref<1x128xf32, #tpu.memory_space<vmem>>, vector<1x128xf32>
    %cst = arith.constant 6.250000e-02 : f32
    %1 = vector.broadcast %cst : f32 to vector<1x128xf32>
    %2 = arith.mulf %0, %1 : vector<1x128xf32>
    %c0_1 = arith.constant 0 : index
    %c0_2 = arith.constant 0 : index
    %3 = vector.load %arg3[%c0_1, %c0_2] : memref<1x128xf32, #tpu.memory_space<vmem>>, vector<1x128xf32>
    %cst_3 = arith.constant 6.250000e-02 : f32
    %4 = vector.broadcast %cst_3 : f32 to vector<1x128xf32>
    %5 = arith.mulf %3, %4 : vector<1x128xf32>
    %6 = arith.mulf %2, %2 : vector<1x128xf32>
    %7 = arith.subf %5, %6 : vector<1x128xf32>
    %cst_4 = arith.constant 0.000000e+00 : f32
    %8 = vector.broadcast %cst_4 : f32 to vector<1x128xf32>
    %9 = arith.maximumf %7, %8 : vector<1x128xf32>
    %c0_5 = arith.constant 0 : index
    %c0_6 = arith.constant 0 : index
    %10 = vector.load %arg1[%c0_5, %c0_6] : memref<16x128xf32, #tpu.memory_space<vmem>>, vector<16x128xf32>
    %11 = vector.broadcast %2 : vector<1x128xf32> to vector<16x128xf32>
    %12 = arith.subf %10, %11 : vector<16x128xf32>
    %cst_7 = arith.constant 9.99999974E-6 : f32
    %13 = vector.broadcast %cst_7 : f32 to vector<1x128xf32>
    %14 = arith.addf %9, %13 : vector<1x128xf32>
    %15 = math.rsqrt %14 : vector<1x128xf32>
    %16 = vector.broadcast %15 : vector<1x128xf32> to vector<16x128xf32>
    %17 = arith.mulf %12, %16 : vector<16x128xf32>
    %c0_8 = arith.constant 0 : index
    %c0_9 = arith.constant 0 : index
    %18 = vector.load %arg4[%c0_8, %c0_9] : memref<1x128xf32, #tpu.memory_space<vmem>>, vector<1x128xf32>
    %19 = vector.broadcast %18 : vector<1x128xf32> to vector<16x128xf32>
    %20 = arith.mulf %17, %19 : vector<16x128xf32>
    %c0_10 = arith.constant 0 : index
    %c0_11 = arith.constant 0 : index
    %21 = vector.load %arg5[%c0_10, %c0_11] : memref<1x128xf32, #tpu.memory_space<vmem>>, vector<1x128xf32>
    %22 = vector.broadcast %21 : vector<1x128xf32> to vector<16x128xf32>
    %23 = arith.addf %20, %22 : vector<16x128xf32>
    %c0_12 = arith.constant 0 : index
    %c0_13 = arith.constant 0 : index
    %24 = vector.load %arg6[%c0_12, %c0_13] : memref<16x128xf32, #tpu.memory_space<vmem>>, vector<16x128xf32>
    tpu.vector_store %arg6[%c0_12, %c0_13], %23 {strides = array<i32>} : memref<16x128xf32, #tpu.memory_space<vmem>>, vector<16x128xf32>,
    return
  }
  func.func @transform_0(%arg0: i32) -> (i32, i32) {
    %c0_i32 = arith.constant 0 : i32
    %c0_i32_0 = arith.constant 0 : i32
    return %arg0, %c0_i32 : i32, i32
  }
  func.func @transform_1(%arg0: i32) -> (i32, i32) {
    %c0_i32 = arith.constant 0 : i32
    %c0_i32_0 = arith.constant 0 : i32
    %c0_i32_1 = arith.constant 0 : i32
    return %c0_i32, %c0_i32_0 : i32, i32
  }
  func.func @transform_2(%arg0: i32) -> (i32, i32) {
    %c0_i32 = arith.constant 0 : i32
    %c0_i32_0 = arith.constant 0 : i32
    %c0_i32_1 = arith.constant 0 : i32
    return %c0_i32, %c0_i32_0 : i32, i32
  }
  func.func @transform_3(%arg0: i32) -> (i32, i32) {
    %c0_i32 = arith.constant 0 : i32
    %c0_i32_0 = arith.constant 0 : i32
    %c0_i32_1 = arith.constant 0 : i32
    return %c0_i32, %c0_i32_0 : i32, i32
  }
  func.func @transform_4(%arg0: i32) -> (i32, i32) {
    %c0_i32 = arith.constant 0 : i32
    %c0_i32_0 = arith.constant 0 : i32
    %c0_i32_1 = arith.constant 0 : i32
    return %c0_i32, %c0_i32_0 : i32, i32
  }
  func.func @transform_5(%arg0: i32) -> (i32, i32) {
    %c0_i32 = arith.constant 0 : i32
    %c0_i32_0 = arith.constant 0 : i32
    return %arg0, %c0_i32 : i32, i32
  }
}

module attributes {stable_mosaic.version = 11 : i64} {
  func.func @_matmul_kernel(%arg0: i32, %arg1: i32, %arg2: memref<32x32xbf16, #tpu.memory_space<vmem>>, %arg3: memref<32x8xbf16, #tpu.memory_space<vmem>>, %arg4: memref<32x8xbf16, #tpu.memory_space<vmem>>, %arg5: memref<32x8xf32, #tpu.memory_space<vmem>>) attributes {dimension_semantics = [#tpu.dimension_semantics<parallel>, #tpu.dimension_semantics<arbitrary>], iteration_bounds = array<i64: 1, 1>, scalar_prefetch = 0 : i64, scratch_operands = 1 : i64, tpu.core_type = #tpu.core_type<tc>, window_params = [{transform_indices = @transform_0, window_bounds = array<i64: 32, 32>}, {transform_indices = @transform_1, window_bounds = array<i64: 32, 8>}, {transform_indices = @transform_2, window_bounds = array<i64: 32, 8>}]} {
    %c0_i32 = arith.constant 0 : i32
    %0 = arith.cmpi eq, %arg1, %c0_i32 : i32
    %1 = arith.extui %0 : i1 to i32
    %c0_i32_0 = arith.constant 0 : i32
    %2 = arith.cmpi ne, %1, %c0_i32_0 : i32
    scf.if %2 {
      %cst_10 = arith.constant 0.000000e+00 : f32
      %12 = vector.broadcast %cst_10 : f32 to vector<32x8xf32>
      %c0_11 = arith.constant 0 : index
      %c0_12 = arith.constant 0 : index
      %13 = vector.load %arg5[%c0_11, %c0_12] : memref<32x8xf32, #tpu.memory_space<vmem>>, vector<32x8xf32>
      tpu.vector_store %arg5[%c0_11, %c0_12], %12 {strides = array<i32>} : memref<32x8xf32, #tpu.memory_space<vmem>>, vector<32x8xf32>,
    } else {
    }
    %c0 = arith.constant 0 : index
    %c0_1 = arith.constant 0 : index
    %3 = vector.load %arg5[%c0, %c0_1] : memref<32x8xf32, #tpu.memory_space<vmem>>, vector<32x8xf32>
    %c0_2 = arith.constant 0 : index
    %c0_3 = arith.constant 0 : index
    %4 = vector.load %arg2[%c0_2, %c0_3] : memref<32x32xbf16, #tpu.memory_space<vmem>>, vector<32x32xbf16>
    %c0_4 = arith.constant 0 : index
    %c0_5 = arith.constant 0 : index
    %5 = vector.load %arg3[%c0_4, %c0_5] : memref<32x8xbf16, #tpu.memory_space<vmem>>, vector<32x8xbf16>
    %cst = arith.constant dense<0.000000e+00> : vector<32x8xf32>
    %6 = tpu.matmul %4, %5, %cst {dimension_numbers = #tpu.dot_dimension_numbers<[1], [0], [0], [1], [0, 0, 1, 1], [], []>} : vector<32x32xbf16>, vector<32x8xbf16>, vector<32x8xf32> -> vector<32x8xf32>
    %7 = arith.addf %3, %6 : vector<32x8xf32>
    %c0_6 = arith.constant 0 : index
    %c0_7 = arith.constant 0 : index
    %8 = vector.load %arg5[%c0_6, %c0_7] : memref<32x8xf32, #tpu.memory_space<vmem>>, vector<32x8xf32>
    tpu.vector_store %arg5[%c0_6, %c0_7], %7 {strides = array<i32>} : memref<32x8xf32, #tpu.memory_space<vmem>>, vector<32x8xf32>,
    %c0_i32_8 = arith.constant 0 : i32
    %9 = arith.cmpi eq, %arg1, %c0_i32_8 : i32
    %10 = arith.extui %9 : i1 to i32
    %c0_i32_9 = arith.constant 0 : i32
    %11 = arith.cmpi ne, %10, %c0_i32_9 : i32
    scf.if %11 {
      %c0_10 = arith.constant 0 : index
      %c0_11 = arith.constant 0 : index
      %12 = vector.load %arg5[%c0_10, %c0_11] : memref<32x8xf32, #tpu.memory_space<vmem>>, vector<32x8xf32>
      %13 = arith.truncf %12 : vector<32x8xf32> to vector<32x8xbf16>
      %c0_12 = arith.constant 0 : index
      %c0_13 = arith.constant 0 : index
      %14 = vector.load %arg4[%c0_12, %c0_13] : memref<32x8xbf16, #tpu.memory_space<vmem>>, vector<32x8xbf16>
      tpu.vector_store %arg4[%c0_12, %c0_13], %13 {strides = array<i32>} : memref<32x8xbf16, #tpu.memory_space<vmem>>, vector<32x8xbf16>,
    } else {
    }
    return
  }
  func.func @transform_0(%arg0: i32, %arg1: i32) -> (i32, i32) {
    %c0_i32 = arith.constant 0 : i32
    return %arg0, %arg1 : i32, i32
  }
  func.func @transform_1(%arg0: i32, %arg1: i32) -> (i32, i32) {
    %c0_i32 = arith.constant 0 : i32
    %c0_i32_0 = arith.constant 0 : i32
    return %arg1, %c0_i32 : i32, i32
  }
  func.func @transform_2(%arg0: i32, %arg1: i32) -> (i32, i32) {
    %c0_i32 = arith.constant 0 : i32
    %c0_i32_0 = arith.constant 0 : i32
    return %arg0, %c0_i32 : i32, i32
  }
}

module attributes {stable_mosaic.version = 11 : i64} {
  func.func @_proj_stats_kernel(%arg0: i32, %arg1: memref<32x40xbf16, #tpu.memory_space<vmem>>, %arg2: memref<40x128xbf16, #tpu.memory_space<vmem>>, %arg3: memref<1x128xf32, #tpu.memory_space<vmem>>, %arg4: memref<32x128xf32, #tpu.memory_space<vmem>>, %arg5: memref<1x128xf32, #tpu.memory_space<vmem>>, %arg6: memref<1x128xf32, #tpu.memory_space<vmem>>) attributes {dimension_semantics = [#tpu.dimension_semantics<arbitrary>], iteration_bounds = array<i64: 1>, scalar_prefetch = 0 : i64, scratch_operands = 0 : i64, tpu.core_type = #tpu.core_type<tc>, window_params = [{transform_indices = @transform_0, window_bounds = array<i64: 32, 40>}, {pipeline_mode = #tpu.pipeline_mode<synchronous>, transform_indices = @transform_1, window_bounds = array<i64: 40, 128>}, {pipeline_mode = #tpu.pipeline_mode<synchronous>, transform_indices = @transform_2, window_bounds = array<i64: 1, 128>}, {transform_indices = @transform_3, window_bounds = array<i64: 32, 128>}, {pipeline_mode = #tpu.pipeline_mode<synchronous>, transform_indices = @transform_4, window_bounds = array<i64: 1, 128>}, {pipeline_mode = #tpu.pipeline_mode<synchronous>, transform_indices = @transform_5, window_bounds = array<i64: 1, 128>}]} {
    %c0 = arith.constant 0 : index
    %c0_0 = arith.constant 0 : index
    %0 = vector.load %arg1[%c0, %c0_0] : memref<32x40xbf16, #tpu.memory_space<vmem>>, vector<32x40xbf16>
    %c0_1 = arith.constant 0 : index
    %c0_2 = arith.constant 0 : index
    %1 = vector.load %arg2[%c0_1, %c0_2] : memref<40x128xbf16, #tpu.memory_space<vmem>>, vector<40x128xbf16>
    %cst = arith.constant dense<0.000000e+00> : vector<32x128xf32>
    %2 = tpu.matmul %0, %1, %cst {dimension_numbers = #tpu.dot_dimension_numbers<[1], [0], [0], [1], [0, 0, 1, 1], [], []>} : vector<32x40xbf16>, vector<40x128xbf16>, vector<32x128xf32> -> vector<32x128xf32>
    %c0_3 = arith.constant 0 : index
    %c0_4 = arith.constant 0 : index
    %3 = vector.load %arg3[%c0_3, %c0_4] : memref<1x128xf32, #tpu.memory_space<vmem>>, vector<1x128xf32>
    %4 = vector.broadcast %3 : vector<1x128xf32> to vector<32x128xf32>
    %5 = arith.addf %2, %4 : vector<32x128xf32>
    %6 = tpu.iota {dimensions = array<i32: 1>} : vector<32x128xi32>
    %c8_i32 = arith.constant 8 : i32
    %7 = vector.broadcast %c8_i32 : i32 to vector<32x128xi32>
    %8 = arith.cmpi slt, %6, %7 : vector<32x128xi32>
    %cst_5 = arith.constant 0.000000e+00 : f32
    %9 = vector.broadcast %cst_5 : f32 to vector<32x128xf32>
    %10 = arith.maximumf %5, %9 : vector<32x128xf32>
    %11 = arith.select %8, %5, %10 : vector<32x128xi1>, vector<32x128xf32>
    %c0_6 = arith.constant 0 : index
    %c0_7 = arith.constant 0 : index
    %12 = vector.load %arg4[%c0_6, %c0_7] : memref<32x128xf32, #tpu.memory_space<vmem>>, vector<32x128xf32>
    tpu.vector_store %arg4[%c0_6, %c0_7], %11 {strides = array<i32>} : memref<32x128xf32, #tpu.memory_space<vmem>>, vector<32x128xf32>,
    %c0_i32 = arith.constant 0 : i32
    %13 = arith.cmpi eq, %arg0, %c0_i32 : i32
    %14 = arith.extui %13 : i1 to i32
    %c0_i32_8 = arith.constant 0 : i32
    %15 = arith.cmpi ne, %14, %c0_i32_8 : i32
    scf.if %15 {
      %cst_19 = arith.constant 0.000000e+00 : f32
      %27 = vector.broadcast %cst_19 : f32 to vector<1x128xf32>
      %c0_20 = arith.constant 0 : index
      %c0_21 = arith.constant 0 : index
      %28 = vector.load %arg5[%c0_20, %c0_21] : memref<1x128xf32, #tpu.memory_space<vmem>>, vector<1x128xf32>
      tpu.vector_store %arg5[%c0_20, %c0_21], %27 {strides = array<i32>} : memref<1x128xf32, #tpu.memory_space<vmem>>, vector<1x128xf32>,
      %cst_22 = arith.constant 0.000000e+00 : f32
      %29 = vector.broadcast %cst_22 : f32 to vector<1x128xf32>
      %c0_23 = arith.constant 0 : index
      %c0_24 = arith.constant 0 : index
      %30 = vector.load %arg6[%c0_23, %c0_24] : memref<1x128xf32, #tpu.memory_space<vmem>>, vector<1x128xf32>
      tpu.vector_store %arg6[%c0_23, %c0_24], %29 {strides = array<i32>} : memref<1x128xf32, #tpu.memory_space<vmem>>, vector<1x128xf32>,
    } else {
    }
    %c0_9 = arith.constant 0 : index
    %c0_10 = arith.constant 0 : index
    %16 = vector.load %arg5[%c0_9, %c0_10] : memref<1x128xf32, #tpu.memory_space<vmem>>, vector<1x128xf32>
    %cst_11 = arith.constant dense<0.000000e+00> : vector<128xf32>
    %17 = vector.multi_reduction <add>, %11, %cst_11 [0] : vector<32x128xf32> to vector<128xf32>
    %18 = vector.shape_cast %17 : vector<128xf32> to vector<1x128xf32>
    %19 = arith.addf %16, %18 : vector<1x128xf32>
    %c0_12 = arith.constant 0 : index
    %c0_13 = arith.constant 0 : index
    %20 = vector.load %arg5[%c0_12, %c0_13] : memref<1x128xf32, #tpu.memory_space<vmem>>, vector<1x128xf32>
    tpu.vector_store %arg5[%c0_12, %c0_13], %19 {strides = array<i32>} : memref<1x128xf32, #tpu.memory_space<vmem>>, vector<1x128xf32>,
    %c0_14 = arith.constant 0 : index
    %c0_15 = arith.constant 0 : index
    %21 = vector.load %arg6[%c0_14, %c0_15] : memref<1x128xf32, #tpu.memory_space<vmem>>, vector<1x128xf32>
    %22 = arith.mulf %11, %11 : vector<32x128xf32>
    %cst_16 = arith.constant dense<0.000000e+00> : vector<128xf32>
    %23 = vector.multi_reduction <add>, %22, %cst_16 [0] : vector<32x128xf32> to vector<128xf32>
    %24 = vector.shape_cast %23 : vector<128xf32> to vector<1x128xf32>
    %25 = arith.addf %21, %24 : vector<1x128xf32>
    %c0_17 = arith.constant 0 : index
    %c0_18 = arith.constant 0 : index
    %26 = vector.load %arg6[%c0_17, %c0_18] : memref<1x128xf32, #tpu.memory_space<vmem>>, vector<1x128xf32>
    tpu.vector_store %arg6[%c0_17, %c0_18], %25 {strides = array<i32>} : memref<1x128xf32, #tpu.memory_space<vmem>>, vector<1x128xf32>,
    return
  }
  func.func @transform_0(%arg0: i32) -> (i32, i32) {
    %c0_i32 = arith.constant 0 : i32
    %c0_i32_0 = arith.constant 0 : i32
    return %arg0, %c0_i32 : i32, i32
  }
  func.func @transform_1(%arg0: i32) -> (i32, i32) {
    %c0_i32 = arith.constant 0 : i32
    %c0_i32_0 = arith.constant 0 : i32
    %c0_i32_1 = arith.constant 0 : i32
    return %c0_i32, %c0_i32_0 : i32, i32
  }
  func.func @transform_2(%arg0: i32) -> (i32, i32) {
    %c0_i32 = arith.constant 0 : i32
    %c0_i32_0 = arith.constant 0 : i32
    %c0_i32_1 = arith.constant 0 : i32
    return %c0_i32, %c0_i32_0 : i32, i32
  }
  func.func @transform_3(%arg0: i32) -> (i32, i32) {
    %c0_i32 = arith.constant 0 : i32
    %c0_i32_0 = arith.constant 0 : i32
    return %arg0, %c0_i32 : i32, i32
  }
  func.func @transform_4(%arg0: i32) -> (i32, i32) {
    %c0_i32 = arith.constant 0 : i32
    %c0_i32_0 = arith.constant 0 : i32
    %c0_i32_1 = arith.constant 0 : i32
    return %c0_i32, %c0_i32_0 : i32, i32
  }
  func.func @transform_5(%arg0: i32) -> (i32, i32) {
    %c0_i32 = arith.constant 0 : i32
    %c0_i32_0 = arith.constant 0 : i32
    %c0_i32_1 = arith.constant 0 : i32
    return %c0_i32, %c0_i32_0 : i32, i32
  }
}

module attributes {stable_mosaic.version = 11 : i64} {
  func.func @_matmul_kernel(%arg0: i32, %arg1: i32, %arg2: memref<16x32xbf16, #tpu.memory_space<vmem>>, %arg3: memref<16x8xbf16, #tpu.memory_space<vmem>>, %arg4: memref<32x8xbf16, #tpu.memory_space<vmem>>, %arg5: memref<32x8xf32, #tpu.memory_space<vmem>>) attributes {dimension_semantics = [#tpu.dimension_semantics<parallel>, #tpu.dimension_semantics<arbitrary>], iteration_bounds = array<i64: 1, 1>, scalar_prefetch = 0 : i64, scratch_operands = 1 : i64, tpu.core_type = #tpu.core_type<tc>, window_params = [{transform_indices = @transform_0, window_bounds = array<i64: 16, 32>}, {transform_indices = @transform_1, window_bounds = array<i64: 16, 8>}, {transform_indices = @transform_2, window_bounds = array<i64: 32, 8>}]} {
    %c0_i32 = arith.constant 0 : i32
    %0 = arith.cmpi eq, %arg1, %c0_i32 : i32
    %1 = arith.extui %0 : i1 to i32
    %c0_i32_0 = arith.constant 0 : i32
    %2 = arith.cmpi ne, %1, %c0_i32_0 : i32
    scf.if %2 {
      %cst_10 = arith.constant 0.000000e+00 : f32
      %12 = vector.broadcast %cst_10 : f32 to vector<32x8xf32>
      %c0_11 = arith.constant 0 : index
      %c0_12 = arith.constant 0 : index
      %13 = vector.load %arg5[%c0_11, %c0_12] : memref<32x8xf32, #tpu.memory_space<vmem>>, vector<32x8xf32>
      tpu.vector_store %arg5[%c0_11, %c0_12], %12 {strides = array<i32>} : memref<32x8xf32, #tpu.memory_space<vmem>>, vector<32x8xf32>,
    } else {
    }
    %c0 = arith.constant 0 : index
    %c0_1 = arith.constant 0 : index
    %3 = vector.load %arg5[%c0, %c0_1] : memref<32x8xf32, #tpu.memory_space<vmem>>, vector<32x8xf32>
    %c0_2 = arith.constant 0 : index
    %c0_3 = arith.constant 0 : index
    %4 = vector.load %arg2[%c0_2, %c0_3] : memref<16x32xbf16, #tpu.memory_space<vmem>>, vector<16x32xbf16>
    %c0_4 = arith.constant 0 : index
    %c0_5 = arith.constant 0 : index
    %5 = vector.load %arg3[%c0_4, %c0_5] : memref<16x8xbf16, #tpu.memory_space<vmem>>, vector<16x8xbf16>
    %cst = arith.constant dense<0.000000e+00> : vector<32x8xf32>
    %6 = tpu.matmul %4, %5, %cst {dimension_numbers = #tpu.dot_dimension_numbers<[0], [0], [1], [1], [0, 1, 1, 1], [], []>} : vector<16x32xbf16>, vector<16x8xbf16>, vector<32x8xf32> -> vector<32x8xf32>
    %7 = arith.addf %3, %6 : vector<32x8xf32>
    %c0_6 = arith.constant 0 : index
    %c0_7 = arith.constant 0 : index
    %8 = vector.load %arg5[%c0_6, %c0_7] : memref<32x8xf32, #tpu.memory_space<vmem>>, vector<32x8xf32>
    tpu.vector_store %arg5[%c0_6, %c0_7], %7 {strides = array<i32>} : memref<32x8xf32, #tpu.memory_space<vmem>>, vector<32x8xf32>,
    %c0_i32_8 = arith.constant 0 : i32
    %9 = arith.cmpi eq, %arg1, %c0_i32_8 : i32
    %10 = arith.extui %9 : i1 to i32
    %c0_i32_9 = arith.constant 0 : i32
    %11 = arith.cmpi ne, %10, %c0_i32_9 : i32
    scf.if %11 {
      %c0_10 = arith.constant 0 : index
      %c0_11 = arith.constant 0 : index
      %12 = vector.load %arg5[%c0_10, %c0_11] : memref<32x8xf32, #tpu.memory_space<vmem>>, vector<32x8xf32>
      %13 = arith.truncf %12 : vector<32x8xf32> to vector<32x8xbf16>
      %c0_12 = arith.constant 0 : index
      %c0_13 = arith.constant 0 : index
      %14 = vector.load %arg4[%c0_12, %c0_13] : memref<32x8xbf16, #tpu.memory_space<vmem>>, vector<32x8xbf16>
      tpu.vector_store %arg4[%c0_12, %c0_13], %13 {strides = array<i32>} : memref<32x8xbf16, #tpu.memory_space<vmem>>, vector<32x8xbf16>,
    } else {
    }
    return
  }
  func.func @transform_0(%arg0: i32, %arg1: i32) -> (i32, i32) {
    %c0_i32 = arith.constant 0 : i32
    return %arg1, %arg0 : i32, i32
  }
  func.func @transform_1(%arg0: i32, %arg1: i32) -> (i32, i32) {
    %c0_i32 = arith.constant 0 : i32
    %c0_i32_0 = arith.constant 0 : i32
    return %arg1, %c0_i32 : i32, i32
  }
  func.func @transform_2(%arg0: i32, %arg1: i32) -> (i32, i32) {
    %c0_i32 = arith.constant 0 : i32
    %c0_i32_0 = arith.constant 0 : i32
    return %arg0, %c0_i32 : i32, i32
  }
}

module attributes {stable_mosaic.version = 11 : i64} {
  func.func @_bn_apply_kernel(%arg0: i32, %arg1: memref<32x128xf32, #tpu.memory_space<vmem>>, %arg2: memref<1x128xf32, #tpu.memory_space<vmem>>, %arg3: memref<1x128xf32, #tpu.memory_space<vmem>>, %arg4: memref<1x128xf32, #tpu.memory_space<vmem>>, %arg5: memref<1x128xf32, #tpu.memory_space<vmem>>, %arg6: memref<32x128xf32, #tpu.memory_space<vmem>>) attributes {dimension_semantics = [#tpu.dimension_semantics<parallel>], iteration_bounds = array<i64: 1>, scalar_prefetch = 0 : i64, scratch_operands = 0 : i64, tpu.core_type = #tpu.core_type<tc>, window_params = [{transform_indices = @transform_0, window_bounds = array<i64: 32, 128>}, {pipeline_mode = #tpu.pipeline_mode<synchronous>, transform_indices = @transform_1, window_bounds = array<i64: 1, 128>}, {pipeline_mode = #tpu.pipeline_mode<synchronous>, transform_indices = @transform_2, window_bounds = array<i64: 1, 128>}, {pipeline_mode = #tpu.pipeline_mode<synchronous>, transform_indices = @transform_3, window_bounds = array<i64: 1, 128>}, {pipeline_mode = #tpu.pipeline_mode<synchronous>, transform_indices = @transform_4, window_bounds = array<i64: 1, 128>}, {transform_indices = @transform_5, window_bounds = array<i64: 32, 128>}]} {
    %c0 = arith.constant 0 : index
    %c0_0 = arith.constant 0 : index
    %0 = vector.load %arg2[%c0, %c0_0] : memref<1x128xf32, #tpu.memory_space<vmem>>, vector<1x128xf32>
    %cst = arith.constant 3.125000e-02 : f32
    %1 = vector.broadcast %cst : f32 to vector<1x128xf32>
    %2 = arith.mulf %0, %1 : vector<1x128xf32>
    %c0_1 = arith.constant 0 : index
    %c0_2 = arith.constant 0 : index
    %3 = vector.load %arg3[%c0_1, %c0_2] : memref<1x128xf32, #tpu.memory_space<vmem>>, vector<1x128xf32>
    %cst_3 = arith.constant 3.125000e-02 : f32
    %4 = vector.broadcast %cst_3 : f32 to vector<1x128xf32>
    %5 = arith.mulf %3, %4 : vector<1x128xf32>
    %6 = arith.mulf %2, %2 : vector<1x128xf32>
    %7 = arith.subf %5, %6 : vector<1x128xf32>
    %cst_4 = arith.constant 0.000000e+00 : f32
    %8 = vector.broadcast %cst_4 : f32 to vector<1x128xf32>
    %9 = arith.maximumf %7, %8 : vector<1x128xf32>
    %c0_5 = arith.constant 0 : index
    %c0_6 = arith.constant 0 : index
    %10 = vector.load %arg1[%c0_5, %c0_6] : memref<32x128xf32, #tpu.memory_space<vmem>>, vector<32x128xf32>
    %11 = vector.broadcast %2 : vector<1x128xf32> to vector<32x128xf32>
    %12 = arith.subf %10, %11 : vector<32x128xf32>
    %cst_7 = arith.constant 9.99999974E-6 : f32
    %13 = vector.broadcast %cst_7 : f32 to vector<1x128xf32>
    %14 = arith.addf %9, %13 : vector<1x128xf32>
    %15 = math.rsqrt %14 : vector<1x128xf32>
    %16 = vector.broadcast %15 : vector<1x128xf32> to vector<32x128xf32>
    %17 = arith.mulf %12, %16 : vector<32x128xf32>
    %c0_8 = arith.constant 0 : index
    %c0_9 = arith.constant 0 : index
    %18 = vector.load %arg4[%c0_8, %c0_9] : memref<1x128xf32, #tpu.memory_space<vmem>>, vector<1x128xf32>
    %19 = vector.broadcast %18 : vector<1x128xf32> to vector<32x128xf32>
    %20 = arith.mulf %17, %19 : vector<32x128xf32>
    %c0_10 = arith.constant 0 : index
    %c0_11 = arith.constant 0 : index
    %21 = vector.load %arg5[%c0_10, %c0_11] : memref<1x128xf32, #tpu.memory_space<vmem>>, vector<1x128xf32>
    %22 = vector.broadcast %21 : vector<1x128xf32> to vector<32x128xf32>
    %23 = arith.addf %20, %22 : vector<32x128xf32>
    %c0_12 = arith.constant 0 : index
    %c0_13 = arith.constant 0 : index
    %24 = vector.load %arg6[%c0_12, %c0_13] : memref<32x128xf32, #tpu.memory_space<vmem>>, vector<32x128xf32>
    tpu.vector_store %arg6[%c0_12, %c0_13], %23 {strides = array<i32>} : memref<32x128xf32, #tpu.memory_space<vmem>>, vector<32x128xf32>,
    return
  }
  func.func @transform_0(%arg0: i32) -> (i32, i32) {
    %c0_i32 = arith.constant 0 : i32
    %c0_i32_0 = arith.constant 0 : i32
    return %arg0, %c0_i32 : i32, i32
  }
  func.func @transform_1(%arg0: i32) -> (i32, i32) {
    %c0_i32 = arith.constant 0 : i32
    %c0_i32_0 = arith.constant 0 : i32
    %c0_i32_1 = arith.constant 0 : i32
    return %c0_i32, %c0_i32_0 : i32, i32
  }
  func.func @transform_2(%arg0: i32) -> (i32, i32) {
    %c0_i32 = arith.constant 0 : i32
    %c0_i32_0 = arith.constant 0 : i32
    %c0_i32_1 = arith.constant 0 : i32
    return %c0_i32, %c0_i32_0 : i32, i32
  }
  func.func @transform_3(%arg0: i32) -> (i32, i32) {
    %c0_i32 = arith.constant 0 : i32
    %c0_i32_0 = arith.constant 0 : i32
    %c0_i32_1 = arith.constant 0 : i32
    return %c0_i32, %c0_i32_0 : i32, i32
  }
  func.func @transform_4(%arg0: i32) -> (i32, i32) {
    %c0_i32 = arith.constant 0 : i32
    %c0_i32_0 = arith.constant 0 : i32
    %c0_i32_1 = arith.constant 0 : i32
    return %c0_i32, %c0_i32_0 : i32, i32
  }
  func.func @transform_5(%arg0: i32) -> (i32, i32) {
    %c0_i32 = arith.constant 0 : i32
    %c0_i32_0 = arith.constant 0 : i32
    return %arg0, %c0_i32 : i32, i32
  }
}

</mosaic_0001>

<llo_original>
// kernel: lgnn_layer.10
$region0: #{lgnn_layer.10}
  #allocation0 [shape = 'u32[]', space=smem, size = 0x4, offset = 0x4, fixed_abs, tag = 'smem constant byte address 0x4 - core index']
  #allocation1 [shape = 'u32[144,128]{1,0:T(1,128)}', space=vmem, size = 0x12000, scoped, tag = 'internal scratch']
  #allocation2 [shape = 'f32[16,8]{1,0:T(8,128)}', space=vmem, size = 0x2000, scoped, tag = 'scratch operand']
  %s0 = inlined_call_operand.vmem [shape: bf16[16,16], index: 0, kind: input, shape index: {}]
  %s1 = inlined_call_operand.vmem [shape: bf16[16,8], index: 1, kind: input, shape index: {}]
  %s2 = inlined_call_operand.vmem [shape: bf16[16,8], index: 2, kind: output, shape index: {}]
  %s3 = sld [smem:[#allocation0]]
  $region26: #{lgnn_layer.10} parent=0
    _
  %s5 = ssub.s32 1, %s3
  %s6 = scalar_select 0, %s5, %s3
  // Predicated region
  $region2: #{lgnn_layer.10} parent=0 // pred_check
    _
  $region3: #{lgnn_layer.10} parent=0 // pred_check_branch
    %8 = sbr.rel (0) target = $region5
  $region4: #{lgnn_layer.10} parent=0 // pred_region
    _
  $region5: #{lgnn_layer.10} parent=0 // pred_fallthru
    _
  // Predicated region
  $region6: #{lgnn_layer.10} parent=0 // pred_check
    _
  $region7: #{lgnn_layer.10} parent=0 // pred_check_branch
    %10 = sbr.rel (0) target = $region9
  $region8: #{lgnn_layer.10} parent=0 // pred_region
    _
  $region9: #{lgnn_layer.10} parent=0 // pred_fallthru
    _
  %p12 = scmp.eq.s32.totalorder 0, 0
  // Predicated region
  $region10: #{lgnn_layer.10} parent=0 // pred_check
    %p13 = pneg %p12
  $region11: #{lgnn_layer.10} parent=0 // pred_check_branch
    %15 = sbr.rel (%p13) target = $region13
  $region12: #{lgnn_layer.10} parent=0 // pred_region
    %vm16 = vcmask 64512
    %17 = vst.msk [vmem:[#allocation2] sm:$0xff] %vm16, 0.0
    %18 = vst.msk [vmem:[#allocation2 + $0x8] sm:$0xff] %vm16, 0.0
  $region13: #{lgnn_layer.10} parent=0 // pred_fallthru
    _
  %v19 = vld [vmem:[#allocation2] sm:$0xff]
  %v20 = vld [vmem:[#allocation2 + $0x8] sm:$0xff]
  %v21 = vld [vmem:[%s0] sm:$0xf]
  %v22 = vld [vmem:[%s0 + $0x4] sm:$0xf]
  %v23 = vld [vmem:[%s1] sm:$0xf]
  %v24 = vld [vmem:[%s1 + $0x4] sm:$0xf]
  %v27 = vunpack.c.l.b16 %v21
  %v28 = vunpack.c.l.b16 %v22
  %v29 = vpack.c.b16 %v28, %v27
  %v32 = vunpack.c.l.b16 %v23
  %v33 = vunpack.c.l.b16 %v24
  %v34 = vpack.c.b16 %v33, %v32
  %vm36 = vcmask 130048
  %v38 = vsel %vm36, %v29, 0
  %40 = vmatprep.subr.bf16.mxu0 0
  %41 = vmatpush1.bf16.msra.mxu0 %v34
  %42 = vmatprep.subr.bf16.mxu0 0
  %43 = vmatpush1.bf16.msra.mxu0 0
  %44 = vmatprep.subr.bf16.mxu0 0
  %45 = vmatpush1.bf16.msra.mxu0 0
  %46 = vmatprep.subr.bf16.mxu0 0
  %47 = vmatpush1.bf16.msra.mxu0 0
  %48 = vmatprep.subr.bf16.mxu0 0
  %49 = vmatpush1.bf16.msra.mxu0 0
  %50 = vmatprep.subr.bf16.mxu0 0
  %51 = vmatpush1.bf16.msra.mxu0 0
  %52 = vmatprep.subr.bf16.mxu0 0
  %53 = vmatpush1.bf16.msra.mxu0 0
  %54 = vmatprep.subr.bf16.mxu0 0
  %55 = vmatpush1.bf16.msra.mxu0 0
  %56 = vmatprep.subr.bf16.mxu0 0
  %57 = vmatpush1.bf16.msra.mxu0 0
  %58 = vmatprep.subr.bf16.mxu0 0
  %59 = vmatpush1.bf16.msra.mxu0 0
  %60 = vmatprep.subr.bf16.mxu0 0
  %61 = vmatpush1.bf16.msra.mxu0 0
  %62 = vmatprep.subr.bf16.mxu0 0
  %63 = vmatpush1.bf16.msra.mxu0 0
  %64 = vmatprep.subr.bf16.mxu0 0
  %65 = vmatpush1.bf16.msra.mxu0 0
  %66 = vmatprep.subr.bf16.mxu0 0
  %67 = vmatpush1.bf16.msra.mxu0 0
  %68 = vmatprep.subr.bf16.mxu0 0
  %69 = vmatpush1.bf16.msra.mxu0 0
  %70 = vmatprep.subr.bf16.mxu0 0
  %71 = vmatpush1.bf16.msra.mxu0 0
  %72 = vmatprep.mubr.bf16.mxu0 0
  %73 = vmatmul.mubr.bf16.gmra.mrb[0].mxu0 %v38
  %v74 = vpop.f32.mrb[0].mxu0
  %v75 = vadd.f32 0.0, %v74
  %v76 = vpop.f32.mrb[0].mxu0
  %v77 = vpop.f32.mrb[0].mxu0
  %v78 = vadd.f32 0.0, %v77
  %v79 = vpop.f32.mrb[0].mxu0
  %80 = vdwg.mxu0
  %v81 = vadd.f32 %v19, %v75
  %v82 = vadd.f32 %v20, %v78
  %vm83 = vcmask 64512
  %84 = vst.msk [vmem:[#allocation2] sm:$0xff] %vm83, %v81
  %85 = vst.msk [vmem:[#allocation2 + $0x8] sm:$0xff] %vm83, %v82
  // Predicated region
  $region14: #{lgnn_layer.10} parent=0 // pred_check
    %p86 = pneg %p12
  $region15: #{lgnn_layer.10} parent=0 // pred_check_branch
    %88 = sbr.rel (%p86) target = $region17
  $region16: #{lgnn_layer.10} parent=0 // pred_region
    %v89 = vld [vmem:[#allocation2] sm:$0xff]
    %v90 = vld [vmem:[#allocation2 + $0x8] sm:$0xff]
    %v91 = vpack.c.bf16 %v90, %v89
    %v93 = vunpack.c.l.b16 %v91
    %v94 = vunpack.c.h.b16 %v91
    %v95 = vpack.c.b16 %v93, %v93
    %v96 = vpack.c.b16 %v94, %v94
    %vm99 = vcmask 60416
    %100 = vst.msk [vmem:[%s2] sm:$0xf] %vm99, %v95
    %101 = vst.msk [vmem:[%s2 + $0x4] sm:$0xf] %vm99, %v96
  $region17: #{lgnn_layer.10} parent=0 // pred_fallthru
    _
  // Predicated region
  $region18: #{lgnn_layer.10} parent=0 // pred_check
    _
  $region19: #{lgnn_layer.10} parent=0 // pred_check_branch
    %103 = sbr.rel (0) target = $region21
  $region20: #{lgnn_layer.10} parent=0 // pred_region
    _
  $region21: #{lgnn_layer.10} parent=0 // pred_fallthru
    _
  // Predicated region
  $region22: #{lgnn_layer.10} parent=0 // pred_check
    _
  $region23: #{lgnn_layer.10} parent=0 // pred_check_branch
    %105 = sbr.rel (0) target = $region25
  $region24: #{lgnn_layer.10} parent=0 // pred_region
    _
  $region25: #{lgnn_layer.10} parent=0 // pred_fallthru
    _

// kernel: lgnn_layer.12
$region0: #{lgnn_layer.12}
  #allocation0 [shape = 'u32[]', space=smem, size = 0x4, offset = 0x4, fixed_abs, tag = 'smem constant byte address 0x4 - core index']
  #allocation1 [shape = 'u32[144,128]{1,0:T(1,128)}', space=vmem, size = 0x12000, scoped, tag = 'internal scratch']
  #allocation2 [shape = 'f32[16,8]{1,0:T(8,128)}', space=vmem, size = 0x2000, scoped, tag = 'scratch operand']
  %s0 = inlined_call_operand.vmem [shape: bf16[16,32], index: 0, kind: input, shape index: {}]
  %s1 = inlined_call_operand.vmem [shape: bf16[32,8], index: 1, kind: input, shape index: {}]
  %s2 = inlined_call_operand.vmem [shape: bf16[16,8], index: 2, kind: output, shape index: {}]
  %s3 = sld [smem:[#allocation0]]
  $region26: #{lgnn_layer.12} parent=0
    _
  %s5 = ssub.s32 1, %s3
  %s6 = scalar_select 0, %s5, %s3
  // Predicated region
  $region2: #{lgnn_layer.12} parent=0 // pred_check
    _
  $region3: #{lgnn_layer.12} parent=0 // pred_check_branch
    %8 = sbr.rel (0) target = $region5
  $region4: #{lgnn_layer.12} parent=0 // pred_region
    _
  $region5: #{lgnn_layer.12} parent=0 // pred_fallthru
    _
  // Predicated region
  $region6: #{lgnn_layer.12} parent=0 // pred_check
    _
  $region7: #{lgnn_layer.12} parent=0 // pred_check_branch
    %10 = sbr.rel (0) target = $region9
  $region8: #{lgnn_layer.12} parent=0 // pred_region
    _
  $region9: #{lgnn_layer.12} parent=0 // pred_fallthru
    _
  %p12 = scmp.eq.s32.totalorder 0, 0
  // Predicated region
  $region10: #{lgnn_layer.12} parent=0 // pred_check
    %p13 = pneg %p12
  $region11: #{lgnn_layer.12} parent=0 // pred_check_branch
    %15 = sbr.rel (%p13) target = $region13
  $region12: #{lgnn_layer.12} parent=0 // pred_region
    %vm16 = vcmask 64512
    %17 = vst.msk [vmem:[#allocation2] sm:$0xff] %vm16, 0.0
    %18 = vst.msk [vmem:[#allocation2 + $0x8] sm:$0xff] %vm16, 0.0
  $region13: #{lgnn_layer.12} parent=0 // pred_fallthru
    _
  %v19 = vld [vmem:[#allocation2] sm:$0xff]
  %v20 = vld [vmem:[#allocation2 + $0x8] sm:$0xff]
  %v21 = vld [vmem:[%s0] sm:$0xf]
  %v22 = vld [vmem:[%s0 + $0x4] sm:$0xf]
  %v23 = vld [vmem:[%s1] sm:$0xf]
  %v24 = vld [vmem:[%s1 + $0x4] sm:$0xf]
  %v25 = vld [vmem:[%s1 + $0x8] sm:$0xf]
  %v26 = vld [vmem:[%s1 + $0xc] sm:$0xf]
  %v29 = vunpack.c.l.b16 %v21
  %v30 = vunpack.c.l.b16 %v22
  %v31 = vpack.c.b16 %v30, %v29
  %v36 = vunpack.c.l.b16 %v23
  %v37 = vunpack.c.l.b16 %v24
  %v38 = vunpack.c.l.b16 %v25
  %v39 = vunpack.c.l.b16 %v26
  %v40 = vpack.c.b16 %v37, %v36
  %v41 = vpack.c.b16 %v39, %v38
  %vm44 = vcmask 261120
  %v46 = vsel %vm44, %v31, 0
  %48 = vmatprep.subr.bf16.mxu0 0
  %49 = vmatpush1.bf16.msra.mxu0 %v40
  %50 = vmatprep.subr.bf16.mxu0 0
  %51 = vmatpush1.bf16.msra.mxu0 %v41
  %52 = vmatprep.subr.bf16.mxu0 0
  %53 = vmatpush1.bf16.msra.mxu0 0
  %54 = vmatprep.subr.bf16.mxu0 0
  %55 = vmatpush1.bf16.msra.mxu0 0
  %56 = vmatprep.subr.bf16.mxu0 0
  %57 = vmatpush1.bf16.msra.mxu0 0
  %58 = vmatprep.subr.bf16.mxu0 0
  %59 = vmatpush1.bf16.msra.mxu0 0
  %60 = vmatprep.subr.bf16.mxu0 0
  %61 = vmatpush1.bf16.msra.mxu0 0
  %62 = vmatprep.subr.bf16.mxu0 0
  %63 = vmatpush1.bf16.msra.mxu0 0
  %64 = vmatprep.subr.bf16.mxu0 0
  %65 = vmatpush1.bf16.msra.mxu0 0
  %66 = vmatprep.subr.bf16.mxu0 0
  %67 = vmatpush1.bf16.msra.mxu0 0
  %68 = vmatprep.subr.bf16.mxu0 0
  %69 = vmatpush1.bf16.msra.mxu0 0
  %70 = vmatprep.subr.bf16.mxu0 0
  %71 = vmatpush1.bf16.msra.mxu0 0
  %72 = vmatprep.subr.bf16.mxu0 0
  %73 = vmatpush1.bf16.msra.mxu0 0
  %74 = vmatprep.subr.bf16.mxu0 0
  %75 = vmatpush1.bf16.msra.mxu0 0
  %76 = vmatprep.subr.bf16.mxu0 0
  %77 = vmatpush1.bf16.msra.mxu0 0
  %78 = vmatprep.subr.bf16.mxu0 0
  %79 = vmatpush1.bf16.msra.mxu0 0
  %80 = vmatprep.mubr.bf16.mxu0 0
  %81 = vmatmul.mubr.bf16.gmra.mrb[0].mxu0 %v46
  %v82 = vpop.f32.mrb[0].mxu0
  %v83 = vadd.f32 0.0, %v82
  %v84 = vpop.f32.mrb[0].mxu0
  %v85 = vpop.f32.mrb[0].mxu0
  %v86 = vadd.f32 0.0, %v85
  %v87 = vpop.f32.mrb[0].mxu0
  %88 = vdwg.mxu0
  %v89 = vadd.f32 %v19, %v83
  %v90 = vadd.f32 %v20, %v86
  %vm91 = vcmask 64512
  %92 = vst.msk [vmem:[#allocation2] sm:$0xff] %vm91, %v89
  %93 = vst.msk [vmem:[#allocation2 + $0x8] sm:$0xff] %vm91, %v90
  // Predicated region
  $region14: #{lgnn_layer.12} parent=0 // pred_check
    %p94 = pneg %p12
  $region15: #{lgnn_layer.12} parent=0 // pred_check_branch
    %96 = sbr.rel (%p94) target = $region17
  $region16: #{lgnn_layer.12} parent=0 // pred_region
    %v97 = vld [vmem:[#allocation2] sm:$0xff]
    %v98 = vld [vmem:[#allocation2 + $0x8] sm:$0xff]
    %v99 = vpack.c.bf16 %v98, %v97
    %v101 = vunpack.c.l.b16 %v99
    %v102 = vunpack.c.h.b16 %v99
    %v103 = vpack.c.b16 %v101, %v101
    %v104 = vpack.c.b16 %v102, %v102
    %vm107 = vcmask 60416
    %108 = vst.msk [vmem:[%s2] sm:$0xf] %vm107, %v103
    %109 = vst.msk [vmem:[%s2 + $0x4] sm:$0xf] %vm107, %v104
  $region17: #{lgnn_layer.12} parent=0 // pred_fallthru
    _
  // Predicated region
  $region18: #{lgnn_layer.12} parent=0 // pred_check
    _
  $region19: #{lgnn_layer.12} parent=0 // pred_check_branch
    %111 = sbr.rel (0) target = $region21
  $region20: #{lgnn_layer.12} parent=0 // pred_region
    _
  $region21: #{lgnn_layer.12} parent=0 // pred_fallthru
    _
  // Predicated region
  $region22: #{lgnn_layer.12} parent=0 // pred_check
    _
  $region23: #{lgnn_layer.12} parent=0 // pred_check_branch
    %113 = sbr.rel (0) target = $region25
  $region24: #{lgnn_layer.12} parent=0 // pred_region
    _
  $region25: #{lgnn_layer.12} parent=0 // pred_fallthru
    _

// kernel: lgnn_layer.14
$region0: #{lgnn_layer.14}
  #allocation0 [shape = 'u32[]', space=smem, size = 0x4, offset = 0x4, fixed_abs, tag = 'smem constant byte address 0x4 - core index']
  #allocation1 [shape = 'u32[144,128]{1,0:T(1,128)}', space=vmem, size = 0x12000, scoped, tag = 'internal scratch']
  %s0 = inlined_call_operand.vmem [shape: f32[16,128], index: 0, kind: input, shape index: {}]
  %s1 = inlined_call_operand.vmem [shape: f32[1,128], index: 1, kind: input, shape index: {}]
  %s2 = inlined_call_operand.vmem [shape: f32[1,128], index: 2, kind: input, shape index: {}]
  %s3 = inlined_call_operand.vmem [shape: f32[1,128], index: 3, kind: input, shape index: {}]
  %s4 = inlined_call_operand.vmem [shape: f32[1,128], index: 4, kind: input, shape index: {}]
  %s5 = inlined_call_operand.hbm [shape: f32[16,128], index: 5, kind: output, shape index: {}]
  %s6 = sld [smem:[#allocation0]]
  $region30: #{lgnn_layer.14} parent=0
    _
  %s8 = ssub.s32 1, %s6
  %s9 = scalar_select 0, %s8, %s6
  $region1: #{lgnn_layer.14} parent=0
    #allocation2 [shape = 'u8[8192]{0}', space=vmem, size = 0x2000, scoped, tag = 'output window, operand 0, single buffered']
    #allocation3 [shape = 's32[1]{0}', space=sflag, size = 0x4, scoped, tag = 'scoped memory for lgnn_layer.14']
    %10 = vsyncpa [#allocation3], 0
    // Predicated region
    $region2: #{lgnn_layer.14} parent=1 // pred_check
      _
    $region3: #{lgnn_layer.14} parent=1 // pred_check_branch
      %12 = sbr.rel (0) target = $region5
    $region4: #{lgnn_layer.14} parent=1 // pred_region
      _
    $region5: #{lgnn_layer.14} parent=1 // pred_fallthru
      _
    // Predicated region
    $region6: #{lgnn_layer.14} parent=1 // pred_check
      _
    $region7: #{lgnn_layer.14} parent=1 // pred_check_branch
      %14 = sbr.rel (0) target = $region9
    $region8: #{lgnn_layer.14} parent=1 // pred_region
      _
    $region9: #{lgnn_layer.14} parent=1 // pred_fallthru
      _
    // Predicated region
    $region10: #{lgnn_layer.14} parent=1 // pred_check
      _
    $region11: #{lgnn_layer.14} parent=1 // pred_check_branch
      %16 = sbr.rel (0) target = $region13
    $region12: #{lgnn_layer.14} parent=1 // pred_region
      _
    $region13: #{lgnn_layer.14} parent=1 // pred_fallthru
      _
    // Predicated region
    $region14: #{lgnn_layer.14} parent=1 // pred_check
      _
    $region15: #{lgnn_layer.14} parent=1 // pred_check_branch
      %18 = sbr.rel (0) target = $region17
    $region16: #{lgnn_layer.14} parent=1 // pred_region
      _
    $region17: #{lgnn_layer.14} parent=1 // pred_fallthru
      _
    // Predicated region
    $region18: #{lgnn_layer.14} parent=1 // pred_check
      _
    $region19: #{lgnn_layer.14} parent=1 // pred_check_branch
      %20 = sbr.rel (0) target = $region21
    $region20: #{lgnn_layer.14} parent=1 // pred_region
      _
    $region21: #{lgnn_layer.14} parent=1 // pred_fallthru
      _
    %v21 = vld [vmem:[%s1] sm:$0x1]
    %v22 = vmul.f32 %v21, 0.0625
    %v23 = vld [vmem:[%s2] sm:$0x1]
    %v24 = vmul.f32 %v23, 0.0625
    %v25 = vmul.f32 %v22, %v22
    %v26 = vsub.f32 %v24, %v25
    %v27 = vmax.f32 %v26, 0.0
    %v28 = vld [vmem:[%s0] sm:$0xff]
    %v29 = vld [vmem:[%s0 + $0x8] sm:$0xff]
    %v31 = vlaneseq
    %v32 = vshrl.u32 %v31, 7
    %v33 = vsub.s32 0, %v32
    %v34 = vrot.slane %v22, %v33
    %v36 = vsub.f32 %v28, %v34
    %v37 = vsub.f32 %v29, %v34
    %v38 = vadd.f32 %v27, 1e-05
    %v39 = vrsqrt.pop %v38
    %v41 = vlaneseq
    %v42 = vshrl.u32 %v41, 7
    %v43 = vsub.s32 0, %v42
    %v44 = vrot.slane %v39, %v43
    %v46 = vmul.f32 %v36, %v44
    %v47 = vmul.f32 %v37, %v44
    %v48 = vld [vmem:[%s3] sm:$0x1]
    %v50 = vlaneseq
    %v51 = vshrl.u32 %v50, 7
    %v52 = vsub.s32 0, %v51
    %v53 = vrot.slane %v48, %v52
    %v55 = vmul.f32 %v46, %v53
    %v56 = vmul.f32 %v47, %v53
    %v57 = vld [vmem:[%s4] sm:$0x1]
    %v59 = vlaneseq
    %v60 = vshrl.u32 %v59, 7
    %v61 = vsub.s32 0, %v60
    %v62 = vrot.slane %v57, %v61
    %v64 = vadd.f32 %v55, %v62
    %v65 = vadd.f32 %v56, %v62
    %66 = vst [vmem:[#allocation2] sm:$0xff] %v64
    %67 = vst [vmem:[#allocation2 + $0x8] sm:$0xff] %v65
    // Predicated region
    $region22: #{lgnn_layer.14} parent=1 // pred_check
      _
    $region23: #{lgnn_layer.14} parent=1 // pred_check_branch
      %69 = sbr.rel (0) target = $region25
    $region24: #{lgnn_layer.14} parent=1 // pred_region
      %s71 = ssub.s32 256, 256
      %72 = vsyncadd [#allocation3], %s71
      %s73 = sshll.u32 [#allocation2], 4
      %s74 = int_to_ptr.vmem [resolvable:$true] %s73
      %79 = dma.vmem_to_hbm [thread:$0]  %s74, 256, %s5, [#allocation3], 128, 128, 8
    $region25: #{lgnn_layer.14} parent=1 // pred_fallthru
      _
    // Predicated region
    $region26: #{lgnn_layer.14} parent=1 // pred_check
      _
    $region27: #{lgnn_layer.14} parent=1 // pred_check_branch
      %81 = sbr.rel (0) target = $region29
    $region28: #{lgnn_layer.14} parent=1 // pred_region
      %82 = dma.done [#allocation3], 256
    $region29: #{lgnn_layer.14} parent=1 // pred_fallthru
      _
    %83 = vsyncpa [#allocation3], 1

// kernel: lgnn_layer.13
$region0: #{lgnn_layer.13}
  #allocation0 [shape = 'u32[]', space=smem, size = 0x4, offset = 0x4, fixed_abs, tag = 'smem constant byte address 0x4 - core index']
  #allocation1 [shape = 'u32[144,128]{1,0:T(1,128)}', space=vmem, size = 0x12000, scoped, tag = 'internal scratch']
  %s0 = inlined_call_operand.vmem [shape: bf16[16,40], index: 0, kind: input, shape index: {}]
  %s1 = inlined_call_operand.vmem [shape: bf16[40,128], index: 1, kind: input, shape index: {}]
  %s2 = inlined_call_operand.vmem [shape: f32[1,128], index: 2, kind: input, shape index: {}]
  %s3 = inlined_call_operand.vmem [shape: f32[16,128], index: 3, kind: output, shape index: {0}]
  %s4 = inlined_call_operand.vmem [shape: f32[1,128], index: 4, kind: output, shape index: {1}]
  %s5 = inlined_call_operand.vmem [shape: f32[1,128], index: 5, kind: output, shape index: {2}]
  %6 = xla_tuple %s3, %s4, %s5
  %s7 = sld [smem:[#allocation0]]
  $region42: #{lgnn_layer.13} parent=0
    _
  %s9 = ssub.s32 1, %s7
  %s10 = scalar_select 0, %s9, %s7
  // Predicated region
  $region2: #{lgnn_layer.13} parent=0 // pred_check
    _
  $region3: #{lgnn_layer.13} parent=0 // pred_check_branch
    %12 = sbr.rel (0) target = $region5
  $region4: #{lgnn_layer.13} parent=0 // pred_region
    _
  $region5: #{lgnn_layer.13} parent=0 // pred_fallthru
    _
  // Predicated region
  $region6: #{lgnn_layer.13} parent=0 // pred_check
    _
  $region7: #{lgnn_layer.13} parent=0 // pred_check_branch
    %14 = sbr.rel (0) target = $region9
  $region8: #{lgnn_layer.13} parent=0 // pred_region
    _
  $region9: #{lgnn_layer.13} parent=0 // pred_fallthru
    _
  // Predicated region
  $region10: #{lgnn_layer.13} parent=0 // pred_check
    _
  $region11: #{lgnn_layer.13} parent=0 // pred_check_branch
    %16 = sbr.rel (0) target = $region13
  $region12: #{lgnn_layer.13} parent=0 // pred_region
    _
  $region13: #{lgnn_layer.13} parent=0 // pred_fallthru
    _
  %v18 = vld [vmem:[%s0] sm:$0xf]
  %v19 = vld [vmem:[%s0 + $0x4] sm:$0xf]
  %v20 = vld [vmem:[%s1] sm:$0xf]
  %v21 = vld [vmem:[%s1 + $0x4] sm:$0xf]
  %v22 = vld [vmem:[%s1 + $0x8] sm:$0xf]
  %v23 = vld [vmem:[%s1 + $0xc] sm:$0xf]
  %v24 = vld [vmem:[%s1 + $0x10] sm:$0xf]
  %v25 = vld [vmem:[%s2] sm:$0x1]
  %v27 = vlaneseq
  %v28 = vshrl.u32 %v27, 7
  %v29 = vsub.s32 0, %v28
  %v30 = vrot.slane %v25, %v29
  %v34 = vunpack.c.l.b16 %v18
  %v35 = vunpack.c.l.b16 %v19
  %v36 = vpack.c.b16 %v35, %v34
  %v42 = vunpack.c.l.b16 %v20
  %v43 = vunpack.c.l.b16 %v21
  %v44 = vunpack.c.l.b16 %v22
  %v45 = vunpack.c.l.b16 %v23
  %v46 = vunpack.c.l.b16 %v24
  %v47 = vpack.c.b16 %v43, %v42
  %v48 = vpack.c.b16 %v45, %v44
  %v49 = vpack.c.b16 %v46, %v46
  %vm52 = vcmask 326656
  %v54 = vsel %vm52, %v36, 0
  %vm56 = vcmask 1043456
  %v58 = vsel %vm56, %v49, 0
  %60 = vmatprep.subr.bf16.mxu0 0
  %61 = vmatpush1.bf16.msra.mxu0 %v47
  %62 = vmatprep.subr.bf16.mxu0 0
  %63 = vmatpush1.bf16.msra.mxu0 %v48
  %64 = vmatprep.subr.bf16.mxu0 0
  %65 = vmatpush1.bf16.msra.mxu0 %v58
  %66 = vmatprep.subr.bf16.mxu0 0
  %67 = vmatpush1.bf16.msra.mxu0 0
  %68 = vmatprep.subr.bf16.mxu0 0
  %69 = vmatpush1.bf16.msra.mxu0 0
  %70 = vmatprep.subr.bf16.mxu0 0
  %71 = vmatpush1.bf16.msra.mxu0 0
  %72 = vmatprep.subr.bf16.mxu0 0
  %73 = vmatpush1.bf16.msra.mxu0 0
  %74 = vmatprep.subr.bf16.mxu0 0
  %75 = vmatpush1.bf16.msra.mxu0 0
  %76 = vmatprep.subr.bf16.mxu0 0
  %77 = vmatpush1.bf16.msra.mxu0 0
  %78 = vmatprep.subr.bf16.mxu0 0
  %79 = vmatpush1.bf16.msra.mxu0 0
  %80 = vmatprep.subr.bf16.mxu0 0
  %81 = vmatpush1.bf16.msra.mxu0 0
  %82 = vmatprep.subr.bf16.mxu0 0
  %83 = vmatpush1.bf16.msra.mxu0 0
  %84 = vmatprep.subr.bf16.mxu0 0
  %85 = vmatpush1.bf16.msra.mxu0 0
  %86 = vmatprep.subr.bf16.mxu0 0
  %87 = vmatpush1.bf16.msra.mxu0 0
  %88 = vmatprep.subr.bf16.mxu0 0
  %89 = vmatpush1.bf16.msra.mxu0 0
  %90 = vmatprep.subr.bf16.mxu0 0
  %91 = vmatpush1.bf16.msra.mxu0 0
  %92 = vmatprep.mubr.bf16.mxu0 0
  %93 = vmatmul.mubr.bf16.gmra.mrb[0].mxu0 %v54
  %v94 = vpop.f32.mrb[0].mxu0
  %v95 = vadd.f32 %v30, %v94
  %v96 = vpop.f32.mrb[0].mxu0
  %v97 = vpop.f32.mrb[0].mxu0
  %v98 = vadd.f32 %v30, %v97
  %v99 = vpop.f32.mrb[0].mxu0
  %100 = vdwg.mxu0
  %v101 = vlaneseq
  %v102 = vand.u32 %v101, 127
  %vm103 = vcmp.lt.s32.totalorder %v102, 8
  %v104 = vmax.f32 %v95, 0.0
  %v105 = vmax.f32 %v98, 0.0
  %v106 = vsel %vm103, %v95, %v104
  %v107 = vsel %vm103, %v98, %v105
  %108 = vst [vmem:[%s3] sm:$0xff] %v106
  %109 = vst [vmem:[%s3 + $0x8] sm:$0xff] %v107
  %p110 = scmp.eq.s32.totalorder 0, 0
  // Predicated region
  $region14: #{lgnn_layer.13} parent=0 // pred_check
    %p111 = pneg %p110
  $region15: #{lgnn_layer.13} parent=0 // pred_check_branch
    %113 = sbr.rel (%p111) target = $region17
  $region16: #{lgnn_layer.13} parent=0 // pred_region
    %114 = vst [vmem:[%s4] sm:$0x1] 0.0
    %115 = vst [vmem:[%s5] sm:$0x1] 0.0
  $region17: #{lgnn_layer.13} parent=0 // pred_fallthru
    _
  %v116 = vld [vmem:[%s4] sm:$0x1]
  %v117 = vadd.f32 %v106, %v107
  %v118 = vrot.slane %v117, 4
  %v119 = vadd.f32 %v117, %v118
  %v120 = vrot.slane %v119, 2
  %v121 = vadd.f32 %v119, %v120
  %v122 = vrot.slane %v121, 1
  %v123 = vadd.f32 %v121, %v122
  %v124 = vadd.f32 %v116, %v123
  %125 = vst [vmem:[%s4] sm:$0x1] %v124
  %v126 = vld [vmem:[%s5] sm:$0x1]
  %v127 = vmul.f32 %v106, %v106
  %v128 = vmul.f32 %v107, %v107
  %v129 = vadd.f32 %v127, %v128
  %v130 = vrot.slane %v129, 4
  %v131 = vadd.f32 %v129, %v130
  %v132 = vrot.slane %v131, 2
  %v133 = vadd.f32 %v131, %v132
  %v134 = vrot.slane %v133, 1
  %v135 = vadd.f32 %v133, %v134
  %v136 = vadd.f32 %v126, %v135
  %137 = vst [vmem:[%s5] sm:$0x1] %v136
  // Predicated region
  $region18: #{lgnn_layer.13} parent=0 // pred_check
    _
  $region19: #{lgnn_layer.13} parent=0 // pred_check_branch
    %139 = sbr.rel (0) target = $region21
  $region20: #{lgnn_layer.13} parent=0 // pred_region
    _
  $region21: #{lgnn_layer.13} parent=0 // pred_fallthru
    _
  // Predicated region
  $region22: #{lgnn_layer.13} parent=0 // pred_check
    _
  $region23: #{lgnn_layer.13} parent=0 // pred_check_branch
    %141 = sbr.rel (0) target = $region25
  $region24: #{lgnn_layer.13} parent=0 // pred_region
    _
  $region25: #{lgnn_layer.13} parent=0 // pred_fallthru
    _
  // Predicated region
  $region26: #{lgnn_layer.13} parent=0 // pred_check
    _
  $region27: #{lgnn_layer.13} parent=0 // pred_check_branch
    %143 = sbr.rel (0) target = $region29
  $region28: #{lgnn_layer.13} parent=0 // pred_region
    _
  $region29: #{lgnn_layer.13} parent=0 // pred_fallthru
    _
  // Predicated region
  $region30: #{lgnn_layer.13} parent=0 // pred_check
    _
  $region31: #{lgnn_layer.13} parent=0 // pred_check_branch
    %145 = sbr.rel (0) target = $region33
  $region32: #{lgnn_layer.13} parent=0 // pred_region
    _
  $region33: #{lgnn_layer.13} parent=0 // pred_fallthru
    _
  // Predicated region
  $region34: #{lgnn_layer.13} parent=0 // pred_check
    _
  $region35: #{lgnn_layer.13} parent=0 // pred_check_branch
    %147 = sbr.rel (0) target = $region37
  $region36: #{lgnn_layer.13} parent=0 // pred_region
    _
  $region37: #{lgnn_layer.13} parent=0 // pred_fallthru
    _
  // Predicated region
  $region38: #{lgnn_layer.13} parent=0 // pred_check
    _
  $region39: #{lgnn_layer.13} parent=0 // pred_check_branch
    %149 = sbr.rel (0) target = $region41
  $region40: #{lgnn_layer.13} parent=0 // pred_region
    _
  $region41: #{lgnn_layer.13} parent=0 // pred_fallthru
    _

// kernel: lgnn_layer.15
$region0: #{lgnn_layer.15}
  #allocation0 [shape = 'u32[]', space=smem, size = 0x4, offset = 0x4, fixed_abs, tag = 'smem constant byte address 0x4 - core index']
  #allocation1 [shape = 'u32[144,128]{1,0:T(1,128)}', space=vmem, size = 0x12000, scoped, tag = 'internal scratch']
  #allocation2 [shape = 'f32[32,8]{1,0:T(8,128)}', space=vmem, size = 0x4000, scoped, tag = 'scratch operand']
  %s0 = inlined_call_operand.vmem [shape: bf16[32,32], index: 0, kind: input, shape index: {}]
  %s1 = inlined_call_operand.vmem [shape: bf16[32,8], index: 1, kind: input, shape index: {}]
  %s2 = inlined_call_operand.vmem [shape: bf16[32,8], index: 2, kind: output, shape index: {}]
  %s3 = sld [smem:[#allocation0]]
  $region26: #{lgnn_layer.15} parent=0
    _
  %s5 = ssub.s32 1, %s3
  %s6 = scalar_select 0, %s5, %s3
  // Predicated region
  $region2: #{lgnn_layer.15} parent=0 // pred_check
    _
  $region3: #{lgnn_layer.15} parent=0 // pred_check_branch
    %8 = sbr.rel (0) target = $region5
  $region4: #{lgnn_layer.15} parent=0 // pred_region
    _
  $region5: #{lgnn_layer.15} parent=0 // pred_fallthru
    _
  // Predicated region
  $region6: #{lgnn_layer.15} parent=0 // pred_check
    _
  $region7: #{lgnn_layer.15} parent=0 // pred_check_branch
    %10 = sbr.rel (0) target = $region9
  $region8: #{lgnn_layer.15} parent=0 // pred_region
    _
  $region9: #{lgnn_layer.15} parent=0 // pred_fallthru
    _
  %p12 = scmp.eq.s32.totalorder 0, 0
  // Predicated region
  $region10: #{lgnn_layer.15} parent=0 // pred_check
    %p13 = pneg %p12
  $region11: #{lgnn_layer.15} parent=0 // pred_check_branch
    %15 = sbr.rel (%p13) target = $region13
  $region12: #{lgnn_layer.15} parent=0 // pred_region
    %vm16 = vcmask 64512
    %17 = vst.msk [vmem:[#allocation2] sm:$0xff] %vm16, 0.0
    %18 = vst.msk [vmem:[#allocation2 + $0x8] sm:$0xff] %vm16, 0.0
    %19 = vst.msk [vmem:[#allocation2 + $0x10] sm:$0xff] %vm16, 0.0
    %20 = vst.msk [vmem:[#allocation2 + $0x18] sm:$0xff] %vm16, 0.0
  $region13: #{lgnn_layer.15} parent=0 // pred_fallthru
    _
  %v21 = vld [vmem:[#allocation2] sm:$0xff]
  %v22 = vld [vmem:[#allocation2 + $0x8] sm:$0xff]
  %v23 = vld [vmem:[#allocation2 + $0x10] sm:$0xff]
  %v24 = vld [vmem:[#allocation2 + $0x18] sm:$0xff]
  %v25 = vld [vmem:[%s0] sm:$0xf]
  %v26 = vld [vmem:[%s0 + $0x4] sm:$0xf]
  %v27 = vld [vmem:[%s0 + $0x8] sm:$0xf]
  %v28 = vld [vmem:[%s0 + $0xc] sm:$0xf]
  %v29 = vld [vmem:[%s1] sm:$0xf]
  %v30 = vld [vmem:[%s1 + $0x4] sm:$0xf]
  %v31 = vld [vmem:[%s1 + $0x8] sm:$0xf]
  %v32 = vld [vmem:[%s1 + $0xc] sm:$0xf]
  %v37 = vunpack.c.l.b16 %v25
  %v38 = vunpack.c.l.b16 %v26
  %v39 = vunpack.c.l.b16 %v27
  %v40 = vunpack.c.l.b16 %v28
  %v41 = vpack.c.b16 %v38, %v37
  %v42 = vpack.c.b16 %v40, %v39
  %v47 = vunpack.c.l.b16 %v29
  %v48 = vunpack.c.l.b16 %v30
  %v49 = vunpack.c.l.b16 %v31
  %v50 = vunpack.c.l.b16 %v32
  %v51 = vpack.c.b16 %v48, %v47
  %v52 = vpack.c.b16 %v50, %v49
  %vm55 = vcmask 261120
  %v57 = vsel %vm55, %v41, 0
  %v60 = vsel %vm55, %v42, 0
  %62 = vmatprep.subr.bf16.mxu0 0
  %63 = vmatpush1.bf16.msra.mxu0 %v51
  %64 = vmatprep.subr.bf16.mxu0 0
  %65 = vmatpush1.bf16.msra.mxu0 %v52
  %66 = vmatprep.subr.bf16.mxu0 0
  %67 = vmatpush1.bf16.msra.mxu0 0
  %68 = vmatprep.subr.bf16.mxu0 0
  %69 = vmatpush1.bf16.msra.mxu0 0
  %70 = vmatprep.subr.bf16.mxu0 0
  %71 = vmatpush1.bf16.msra.mxu0 0
  %72 = vmatprep.subr.bf16.mxu0 0
  %73 = vmatpush1.bf16.msra.mxu0 0
  %74 = vmatprep.subr.bf16.mxu0 0
  %75 = vmatpush1.bf16.msra.mxu0 0
  %76 = vmatprep.subr.bf16.mxu0 0
  %77 = vmatpush1.bf16.msra.mxu0 0
  %78 = vmatprep.subr.bf16.mxu0 0
  %79 = vmatpush1.bf16.msra.mxu0 0
  %80 = vmatprep.subr.bf16.mxu0 0
  %81 = vmatpush1.bf16.msra.mxu0 0
  %82 = vmatprep.subr.bf16.mxu0 0
  %83 = vmatpush1.bf16.msra.mxu0 0
  %84 = vmatprep.subr.bf16.mxu0 0
  %85 = vmatpush1.bf16.msra.mxu0 0
  %86 = vmatprep.subr.bf16.mxu0 0
  %87 = vmatpush1.bf16.msra.mxu0 0
  %88 = vmatprep.subr.bf16.mxu0 0
  %89 = vmatpush1.bf16.msra.mxu0 0
  %90 = vmatprep.subr.bf16.mxu0 0
  %91 = vmatpush1.bf16.msra.mxu0 0
  %92 = vmatprep.subr.bf16.mxu0 0
  %93 = vmatpush1.bf16.msra.mxu0 0
  %94 = vmatprep.mubr.bf16.mxu0 0
  %95 = vmatmul.mubr.bf16.gmra.mrb[0].mxu0 %v57
  %v96 = vpop.f32.mrb[0].mxu0
  %v97 = vadd.f32 0.0, %v96
  %v98 = vpop.f32.mrb[0].mxu0
  %v99 = vpop.f32.mrb[0].mxu0
  %v100 = vadd.f32 0.0, %v99
  %v101 = vpop.f32.mrb[0].mxu0
  %102 = vmatprep.mubr.bf16.mxu0 0
  %103 = vmatmul.mubr.bf16.gmra.mrb[0].mxu0 %v60
  %v104 = vpop.f32.mrb[0].mxu0
  %v105 = vadd.f32 0.0, %v104
  %v106 = vpop.f32.mrb[0].mxu0
  %v107 = vpop.f32.mrb[0].mxu0
  %v108 = vadd.f32 0.0, %v107
  %v109 = vpop.f32.mrb[0].mxu0
  %110 = vdwg.mxu0
  %v111 = vadd.f32 %v21, %v97
  %v112 = vadd.f32 %v22, %v100
  %v113 = vadd.f32 %v23, %v105
  %v114 = vadd.f32 %v24, %v108
  %vm115 = vcmask 64512
  %116 = vst.msk [vmem:[#allocation2] sm:$0xff] %vm115, %v111
  %117 = vst.msk [vmem:[#allocation2 + $0x8] sm:$0xff] %vm115, %v112
  %118 = vst.msk [vmem:[#allocation2 + $0x10] sm:$0xff] %vm115, %v113
  %119 = vst.msk [vmem:[#allocation2 + $0x18] sm:$0xff] %vm115, %v114
  // Predicated region
  $region14: #{lgnn_layer.15} parent=0 // pred_check
    %p120 = pneg %p12
  $region15: #{lgnn_layer.15} parent=0 // pred_check_branch
    %122 = sbr.rel (%p120) target = $region17
  $region16: #{lgnn_layer.15} parent=0 // pred_region
    %v123 = vld [vmem:[#allocation2] sm:$0xff]
    %v124 = vld [vmem:[#allocation2 + $0x8] sm:$0xff]
    %v125 = vld [vmem:[#allocation2 + $0x10] sm:$0xff]
    %v126 = vld [vmem:[#allocation2 + $0x18] sm:$0xff]
    %v127 = vpack.c.bf16 %v124, %v123
    %v128 = vpack.c.bf16 %v126, %v125
    %v131 = vunpack.c.l.b16 %v127
    %v132 = vunpack.c.h.b16 %v127
    %v133 = vunpack.c.l.b16 %v128
    %v134 = vunpack.c.h.b16 %v128
    %v135 = vpack.c.b16 %v131, %v131
    %v136 = vpack.c.b16 %v132, %v132
    %v137 = vpack.c.b16 %v133, %v133
    %v138 = vpack.c.b16 %v134, %v134
    %vm143 = vcmask 60416
    %144 = vst.msk [vmem:[%s2] sm:$0xf] %vm143, %v135
    %145 = vst.msk [vmem:[%s2 + $0x4] sm:$0xf] %vm143, %v136
    %146 = vst.msk [vmem:[%s2 + $0x8] sm:$0xf] %vm143, %v137
    %147 = vst.msk [vmem:[%s2 + $0xc] sm:$0xf] %vm143, %v138
  $region17: #{lgnn_layer.15} parent=0 // pred_fallthru
    _
  // Predicated region
  $region18: #{lgnn_layer.15} parent=0 // pred_check
    _
  $region19: #{lgnn_layer.15} parent=0 // pred_check_branch
    %149 = sbr.rel (0) target = $region21
  $region20: #{lgnn_layer.15} parent=0 // pred_region
    _
  $region21: #{lgnn_layer.15} parent=0 // pred_fallthru
    _
  // Predicated region
  $region22: #{lgnn_layer.15} parent=0 // pred_check
    _
  $region23: #{lgnn_layer.15} parent=0 // pred_check_branch
    %151 = sbr.rel (0) target = $region25
  $region24: #{lgnn_layer.15} parent=0 // pred_region
    _
  $region25: #{lgnn_layer.15} parent=0 // pred_fallthru
    _

// kernel: lgnn_layer.17
$region0: #{lgnn_layer.17}
  #allocation0 [shape = 'u32[]', space=smem, size = 0x4, offset = 0x4, fixed_abs, tag = 'smem constant byte address 0x4 - core index']
  #allocation1 [shape = 'u32[144,128]{1,0:T(1,128)}', space=vmem, size = 0x12000, scoped, tag = 'internal scratch']
  #allocation2 [shape = 'f32[32,8]{1,0:T(8,128)}', space=vmem, size = 0x4000, scoped, tag = 'scratch operand']
  %s0 = inlined_call_operand.vmem [shape: bf16[16,32], index: 0, kind: input, shape index: {}]
  %s1 = inlined_call_operand.vmem [shape: bf16[16,8], index: 1, kind: input, shape index: {}]
  %s2 = inlined_call_operand.vmem [shape: bf16[32,8], index: 2, kind: output, shape index: {}]
  %s3 = sld [smem:[#allocation0]]
  $region26: #{lgnn_layer.17} parent=0
    _
  %s5 = ssub.s32 1, %s3
  %s6 = scalar_select 0, %s5, %s3
  // Predicated region
  $region2: #{lgnn_layer.17} parent=0 // pred_check
    _
  $region3: #{lgnn_layer.17} parent=0 // pred_check_branch
    %8 = sbr.rel (0) target = $region5
  $region4: #{lgnn_layer.17} parent=0 // pred_region
    _
  $region5: #{lgnn_layer.17} parent=0 // pred_fallthru
    _
  // Predicated region
  $region6: #{lgnn_layer.17} parent=0 // pred_check
    _
  $region7: #{lgnn_layer.17} parent=0 // pred_check_branch
    %10 = sbr.rel (0) target = $region9
  $region8: #{lgnn_layer.17} parent=0 // pred_region
    _
  $region9: #{lgnn_layer.17} parent=0 // pred_fallthru
    _
  %p12 = scmp.eq.s32.totalorder 0, 0
  // Predicated region
  $region10: #{lgnn_layer.17} parent=0 // pred_check
    %p13 = pneg %p12
  $region11: #{lgnn_layer.17} parent=0 // pred_check_branch
    %15 = sbr.rel (%p13) target = $region13
  $region12: #{lgnn_layer.17} parent=0 // pred_region
    %vm16 = vcmask 64512
    %17 = vst.msk [vmem:[#allocation2] sm:$0xff] %vm16, 0.0
    %18 = vst.msk [vmem:[#allocation2 + $0x8] sm:$0xff] %vm16, 0.0
    %19 = vst.msk [vmem:[#allocation2 + $0x10] sm:$0xff] %vm16, 0.0
    %20 = vst.msk [vmem:[#allocation2 + $0x18] sm:$0xff] %vm16, 0.0
  $region13: #{lgnn_layer.17} parent=0 // pred_fallthru
    _
  %v21 = vld [vmem:[#allocation2] sm:$0xff]
  %v22 = vld [vmem:[#allocation2 + $0x8] sm:$0xff]
  %v23 = vld [vmem:[#allocation2 + $0x10] sm:$0xff]
  %v24 = vld [vmem:[#allocation2 + $0x18] sm:$0xff]
  %v25 = vld [vmem:[%s0] sm:$0xf]
  %v26 = vld [vmem:[%s0 + $0x4] sm:$0xf]
  %v27 = vld [vmem:[%s1] sm:$0xf]
  %v28 = vld [vmem:[%s1 + $0x4] sm:$0xf]
  %v31 = vunpack.c.l.b16 %v25
  %v32 = vunpack.c.l.b16 %v26
  %v33 = vpack.c.b16 %v32, %v31
  %35 = vxpose.xlu0.c.b16.start [1/8] %v33, 128
  %36 = vxpose.xlu0.c.b16.cont [2/8] 0, 128
  %37 = vxpose.xlu0.c.b16.cont [3/8] 0, 128
  %38 = vxpose.xlu0.c.b16.cont [4/8] 0, 128
  %39 = vxpose.xlu0.c.b16.cont [5/8] 0, 128
  %40 = vxpose.xlu0.c.b16.cont [6/8] 0, 128
  %41 = vxpose.xlu0.c.b16.cont [7/8] 0, 128
  %42 = vxpose.xlu0.c.b16.end [8/8] 0, 128
  %v43 = vpop.trf.xlu0
  %v44 = vpop.trf.xlu0
  %v45 = vpop.trf.xlu0
  %v46 = vpop.trf.xlu0
  %v47 = vpop.trf.xlu0
  %v48 = vpop.trf.xlu0
  %v49 = vpop.trf.xlu0
  %v50 = vpop.trf.xlu0
  %v53 = vunpack.c.l.b16 %v27
  %v54 = vunpack.c.l.b16 %v28
  %v55 = vpack.c.b16 %v54, %v53
  %vm57 = vcmask 130048
  %v59 = vsel %vm57, %v43, 0
  %v62 = vsel %vm57, %v44, 0
  %64 = vmatprep.subr.bf16.mxu0 0
  %65 = vmatpush1.bf16.msra.mxu0 %v55
  %66 = vmatprep.subr.bf16.mxu0 0
  %67 = vmatpush1.bf16.msra.mxu0 0
  %68 = vmatprep.subr.bf16.mxu0 0
  %69 = vmatpush1.bf16.msra.mxu0 0
  %70 = vmatprep.subr.bf16.mxu0 0
  %71 = vmatpush1.bf16.msra.mxu0 0
  %72 = vmatprep.subr.bf16.mxu0 0
  %73 = vmatpush1.bf16.msra.mxu0 0
  %74 = vmatprep.subr.bf16.mxu0 0
  %75 = vmatpush1.bf16.msra.mxu0 0
  %76 = vmatprep.subr.bf16.mxu0 0
  %77 = vmatpush1.bf16.msra.mxu0 0
  %78 = vmatprep.subr.bf16.mxu0 0
  %79 = vmatpush1.bf16.msra.mxu0 0
  %80 = vmatprep.subr.bf16.mxu0 0
  %81 = vmatpush1.bf16.msra.mxu0 0
  %82 = vmatprep.subr.bf16.mxu0 0
  %83 = vmatpush1.bf16.msra.mxu0 0
  %84 = vmatprep.subr.bf16.mxu0 0
  %85 = vmatpush1.bf16.msra.mxu0 0
  %86 = vmatprep.subr.bf16.mxu0 0
  %87 = vmatpush1.bf16.msra.mxu0 0
  %88 = vmatprep.subr.bf16.mxu0 0
  %89 = vmatpush1.bf16.msra.mxu0 0
  %90 = vmatprep.subr.bf16.mxu0 0
  %91 = vmatpush1.bf16.msra.mxu0 0
  %92 = vmatprep.subr.bf16.mxu0 0
  %93 = vmatpush1.bf16.msra.mxu0 0
  %94 = vmatprep.subr.bf16.mxu0 0
  %95 = vmatpush1.bf16.msra.mxu0 0
  %96 = vmatprep.mubr.bf16.mxu0 0
  %97 = vmatmul.mubr.bf16.gmra.mrb[0].mxu0 %v59
  %v98 = vpop.f32.mrb[0].mxu0
  %v99 = vadd.f32 0.0, %v98
  %v100 = vpop.f32.mrb[0].mxu0
  %v101 = vpop.f32.mrb[0].mxu0
  %v102 = vadd.f32 0.0, %v101
  %v103 = vpop.f32.mrb[0].mxu0
  %104 = vmatprep.mubr.bf16.mxu0 0
  %105 = vmatmul.mubr.bf16.gmra.mrb[0].mxu0 %v62
  %v106 = vpop.f32.mrb[0].mxu0
  %v107 = vadd.f32 0.0, %v106
  %v108 = vpop.f32.mrb[0].mxu0
  %v109 = vpop.f32.mrb[0].mxu0
  %v110 = vadd.f32 0.0, %v109
  %v111 = vpop.f32.mrb[0].mxu0
  %112 = vdwg.mxu0
  %v113 = vadd.f32 %v21, %v99
  %v114 = vadd.f32 %v22, %v102
  %v115 = vadd.f32 %v23, %v107
  %v116 = vadd.f32 %v24, %v110
  %vm117 = vcmask 64512
  %118 = vst.msk [vmem:[#allocation2] sm:$0xff] %vm117, %v113
  %119 = vst.msk [vmem:[#allocation2 + $0x8] sm:$0xff] %vm117, %v114
  %120 = vst.msk [vmem:[#allocation2 + $0x10] sm:$0xff] %vm117, %v115
  %121 = vst.msk [vmem:[#allocation2 + $0x18] sm:$0xff] %vm117, %v116
  // Predicated region
  $region14: #{lgnn_layer.17} parent=0 // pred_check
    %p122 = pneg %p12
  $region15: #{lgnn_layer.17} parent=0 // pred_check_branch
    %124 = sbr.rel (%p122) target = $region17
  $region16: #{lgnn_layer.17} parent=0 // pred_region
    %v125 = vld [vmem:[#allocation2] sm:$0xff]
    %v126 = vld [vmem:[#allocation2 + $0x8] sm:$0xff]
    %v127 = vld [vmem:[#allocation2 + $0x10] sm:$0xff]
    %v128 = vld [vmem:[#allocation2 + $0x18] sm:$0xff]
    %v129 = vpack.c.bf16 %v126, %v125
    %v130 = vpack.c.bf16 %v128, %v127
    %v133 = vunpack.c.l.b16 %v129
    %v134 = vunpack.c.h.b16 %v129
    %v135 = vunpack.c.l.b16 %v130
    %v136 = vunpack.c.h.b16 %v130
    %v137 = vpack.c.b16 %v133, %v133
    %v138 = vpack.c.b16 %v134, %v134
    %v139 = vpack.c.b16 %v135, %v135
    %v140 = vpack.c.b16 %v136, %v136
    %vm145 = vcmask 60416
    %146 = vst.msk [vmem:[%s2] sm:$0xf] %vm145, %v137
    %147 = vst.msk [vmem:[%s2 + $0x4] sm:$0xf] %vm145, %v138
    %148 = vst.msk [vmem:[%s2 + $0x8] sm:$0xf] %vm145, %v139
    %149 = vst.msk [vmem:[%s2 + $0xc] sm:$0xf] %vm145, %v140
  $region17: #{lgnn_layer.17} parent=0 // pred_fallthru
    _
  // Predicated region
  $region18: #{lgnn_layer.17} parent=0 // pred_check
    _
  $region19: #{lgnn_layer.17} parent=0 // pred_check_branch
    %151 = sbr.rel (0) target = $region21
  $region20: #{lgnn_layer.17} parent=0 // pred_region
    _
  $region21: #{lgnn_layer.17} parent=0 // pred_fallthru
    _
  // Predicated region
  $region22: #{lgnn_layer.17} parent=0 // pred_check
    _
  $region23: #{lgnn_layer.17} parent=0 // pred_check_branch
    %153 = sbr.rel (0) target = $region25
  $region24: #{lgnn_layer.17} parent=0 // pred_region
    _
  $region25: #{lgnn_layer.17} parent=0 // pred_fallthru
    _

// kernel: lgnn_layer.18
$region0: #{lgnn_layer.18}
  #allocation0 [shape = 'u32[]', space=smem, size = 0x4, offset = 0x4, fixed_abs, tag = 'smem constant byte address 0x4 - core index']
  #allocation1 [shape = 'u32[144,128]{1,0:T(1,128)}', space=vmem, size = 0x12000, scoped, tag = 'internal scratch']
  %s0 = inlined_call_operand.vmem [shape: bf16[32,40], index: 0, kind: input, shape index: {}]
  %s1 = inlined_call_operand.vmem [shape: bf16[40,128], index: 1, kind: input, shape index: {}]
  %s2 = inlined_call_operand.vmem [shape: f32[1,128], index: 2, kind: input, shape index: {}]
  %s3 = inlined_call_operand.vmem [shape: f32[32,128], index: 3, kind: output, shape index: {0}]
  %s4 = inlined_call_operand.vmem [shape: f32[1,128], index: 4, kind: output, shape index: {1}]
  %s5 = inlined_call_operand.vmem [shape: f32[1,128], index: 5, kind: output, shape index: {2}]
  %6 = xla_tuple %s3, %s4, %s5
  %s7 = sld [smem:[#allocation0]]
  $region42: #{lgnn_layer.18} parent=0
    _
  %s9 = ssub.s32 1, %s7
  %s10 = scalar_select 0, %s9, %s7
  // Predicated region
  $region2: #{lgnn_layer.18} parent=0 // pred_check
    _
  $region3: #{lgnn_layer.18} parent=0 // pred_check_branch
    %12 = sbr.rel (0) target = $region5
  $region4: #{lgnn_layer.18} parent=0 // pred_region
    _
  $region5: #{lgnn_layer.18} parent=0 // pred_fallthru
    _
  // Predicated region
  $region6: #{lgnn_layer.18} parent=0 // pred_check
    _
  $region7: #{lgnn_layer.18} parent=0 // pred_check_branch
    %14 = sbr.rel (0) target = $region9
  $region8: #{lgnn_layer.18} parent=0 // pred_region
    _
  $region9: #{lgnn_layer.18} parent=0 // pred_fallthru
    _
  // Predicated region
  $region10: #{lgnn_layer.18} parent=0 // pred_check
    _
  $region11: #{lgnn_layer.18} parent=0 // pred_check_branch
    %16 = sbr.rel (0) target = $region13
  $region12: #{lgnn_layer.18} parent=0 // pred_region
    _
  $region13: #{lgnn_layer.18} parent=0 // pred_fallthru
    _
  %v18 = vld [vmem:[%s0] sm:$0xf]
  %v19 = vld [vmem:[%s0 + $0x4] sm:$0xf]
  %v20 = vld [vmem:[%s0 + $0x8] sm:$0xf]
  %v21 = vld [vmem:[%s0 + $0xc] sm:$0xf]
  %v22 = vld [vmem:[%s1] sm:$0xf]
  %v23 = vld [vmem:[%s1 + $0x4] sm:$0xf]
  %v24 = vld [vmem:[%s1 + $0x8] sm:$0xf]
  %v25 = vld [vmem:[%s1 + $0xc] sm:$0xf]
  %v26 = vld [vmem:[%s1 + $0x10] sm:$0xf]
  %v27 = vld [vmem:[%s2] sm:$0x1]
  %v29 = vlaneseq
  %v30 = vshrl.u32 %v29, 7
  %v31 = vsub.s32 0, %v30
  %v32 = vrot.slane %v27, %v31
  %v38 = vunpack.c.l.b16 %v18
  %v39 = vunpack.c.l.b16 %v19
  %v40 = vunpack.c.l.b16 %v20
  %v41 = vunpack.c.l.b16 %v21
  %v42 = vpack.c.b16 %v39, %v38
  %v43 = vpack.c.b16 %v41, %v40
  %v49 = vunpack.c.l.b16 %v22
  %v50 = vunpack.c.l.b16 %v23
  %v51 = vunpack.c.l.b16 %v24
  %v52 = vunpack.c.l.b16 %v25
  %v53 = vunpack.c.l.b16 %v26
  %v54 = vpack.c.b16 %v50, %v49
  %v55 = vpack.c.b16 %v52, %v51
  %v56 = vpack.c.b16 %v53, %v53
  %vm59 = vcmask 326656
  %v61 = vsel %vm59, %v42, 0
  %v64 = vsel %vm59, %v43, 0
  %vm66 = vcmask 1043456
  %v68 = vsel %vm66, %v56, 0
  %70 = vmatprep.subr.bf16.mxu0 0
  %71 = vmatpush1.bf16.msra.mxu0 %v54
  %72 = vmatprep.subr.bf16.mxu0 0
  %73 = vmatpush1.bf16.msra.mxu0 %v55
  %74 = vmatprep.subr.bf16.mxu0 0
  %75 = vmatpush1.bf16.msra.mxu0 %v68
  %76 = vmatprep.subr.bf16.mxu0 0
  %77 = vmatpush1.bf16.msra.mxu0 0
  %78 = vmatprep.subr.bf16.mxu0 0
  %79 = vmatpush1.bf16.msra.mxu0 0
  %80 = vmatprep.subr.bf16.mxu0 0
  %81 = vmatpush1.bf16.msra.mxu0 0
  %82 = vmatprep.subr.bf16.mxu0 0
  %83 = vmatpush1.bf16.msra.mxu0 0
  %84 = vmatprep.subr.bf16.mxu0 0
  %85 = vmatpush1.bf16.msra.mxu0 0
  %86 = vmatprep.subr.bf16.mxu0 0
  %87 = vmatpush1.bf16.msra.mxu0 0
  %88 = vmatprep.subr.bf16.mxu0 0
  %89 = vmatpush1.bf16.msra.mxu0 0
  %90 = vmatprep.subr.bf16.mxu0 0
  %91 = vmatpush1.bf16.msra.mxu0 0
  %92 = vmatprep.subr.bf16.mxu0 0
  %93 = vmatpush1.bf16.msra.mxu0 0
  %94 = vmatprep.subr.bf16.mxu0 0
  %95 = vmatpush1.bf16.msra.mxu0 0
  %96 = vmatprep.subr.bf16.mxu0 0
  %97 = vmatpush1.bf16.msra.mxu0 0
  %98 = vmatprep.subr.bf16.mxu0 0
  %99 = vmatpush1.bf16.msra.mxu0 0
  %100 = vmatprep.subr.bf16.mxu0 0
  %101 = vmatpush1.bf16.msra.mxu0 0
  %102 = vmatprep.mubr.bf16.mxu0 0
  %103 = vmatmul.mubr.bf16.gmra.mrb[0].mxu0 %v61
  %v104 = vpop.f32.mrb[0].mxu0
  %v105 = vadd.f32 %v32, %v104
  %v106 = vpop.f32.mrb[0].mxu0
  %v107 = vpop.f32.mrb[0].mxu0
  %v108 = vadd.f32 %v32, %v107
  %v109 = vpop.f32.mrb[0].mxu0
  %110 = vmatprep.mubr.bf16.mxu0 0
  %111 = vmatmul.mubr.bf16.gmra.mrb[0].mxu0 %v64
  %v112 = vpop.f32.mrb[0].mxu0
  %v113 = vadd.f32 %v32, %v112
  %v114 = vpop.f32.mrb[0].mxu0
  %v115 = vpop.f32.mrb[0].mxu0
  %v116 = vadd.f32 %v32, %v115
  %v117 = vpop.f32.mrb[0].mxu0
  %118 = vdwg.mxu0
  %v119 = vlaneseq
  %v120 = vand.u32 %v119, 127
  %vm121 = vcmp.lt.s32.totalorder %v120, 8
  %v122 = vmax.f32 %v105, 0.0
  %v123 = vmax.f32 %v108, 0.0
  %v124 = vmax.f32 %v113, 0.0
  %v125 = vmax.f32 %v116, 0.0
  %v126 = vsel %vm121, %v105, %v122
  %v127 = vsel %vm121, %v108, %v123
  %v128 = vsel %vm121, %v113, %v124
  %v129 = vsel %vm121, %v116, %v125
  %130 = vst [vmem:[%s3] sm:$0xff] %v126
  %131 = vst [vmem:[%s3 + $0x8] sm:$0xff] %v127
  %132 = vst [vmem:[%s3 + $0x10] sm:$0xff] %v128
  %133 = vst [vmem:[%s3 + $0x18] sm:$0xff] %v129
  %p134 = scmp.eq.s32.totalorder 0, 0
  // Predicated region
  $region14: #{lgnn_layer.18} parent=0 // pred_check
    %p135 = pneg %p134
  $region15: #{lgnn_layer.18} parent=0 // pred_check_branch
    %137 = sbr.rel (%p135) target = $region17
  $region16: #{lgnn_layer.18} parent=0 // pred_region
    %138 = vst [vmem:[%s4] sm:$0x1] 0.0
    %139 = vst [vmem:[%s5] sm:$0x1] 0.0
  $region17: #{lgnn_layer.18} parent=0 // pred_fallthru
    _
  %v140 = vld [vmem:[%s4] sm:$0x1]
  %v141 = vadd.f32 %v126, %v127
  %v142 = vadd.f32 %v141, %v128
  %v143 = vadd.f32 %v142, %v129
  %v144 = vrot.slane %v143, 4
  %v145 = vadd.f32 %v143, %v144
  %v146 = vrot.slane %v145, 2
  %v147 = vadd.f32 %v145, %v146
  %v148 = vrot.slane %v147, 1
  %v149 = vadd.f32 %v147, %v148
  %v150 = vadd.f32 %v140, %v149
  %151 = vst [vmem:[%s4] sm:$0x1] %v150
  %v152 = vld [vmem:[%s5] sm:$0x1]
  %v153 = vmul.f32 %v126, %v126
  %v154 = vmul.f32 %v127, %v127
  %v155 = vmul.f32 %v128, %v128
  %v156 = vmul.f32 %v129, %v129
  %v157 = vadd.f32 %v153, %v154
  %v158 = vadd.f32 %v157, %v155
  %v159 = vadd.f32 %v158, %v156
  %v160 = vrot.slane %v159, 4
  %v161 = vadd.f32 %v159, %v160
  %v162 = vrot.slane %v161, 2
  %v163 = vadd.f32 %v161, %v162
  %v164 = vrot.slane %v163, 1
  %v165 = vadd.f32 %v163, %v164
  %v166 = vadd.f32 %v152, %v165
  %167 = vst [vmem:[%s5] sm:$0x1] %v166
  // Predicated region
  $region18: #{lgnn_layer.18} parent=0 // pred_check
    _
  $region19: #{lgnn_layer.18} parent=0 // pred_check_branch
    %169 = sbr.rel (0) target = $region21
  $region20: #{lgnn_layer.18} parent=0 // pred_region
    _
  $region21: #{lgnn_layer.18} parent=0 // pred_fallthru
    _
  // Predicated region
  $region22: #{lgnn_layer.18} parent=0 // pred_check
    _
  $region23: #{lgnn_layer.18} parent=0 // pred_check_branch
    %171 = sbr.rel (0) target = $region25
  $region24: #{lgnn_layer.18} parent=0 // pred_region
    _
  $region25: #{lgnn_layer.18} parent=0 // pred_fallthru
    _
  // Predicated region
  $region26: #{lgnn_layer.18} parent=0 // pred_check
    _
  $region27: #{lgnn_layer.18} parent=0 // pred_check_branch
    %173 = sbr.rel (0) target = $region29
  $region28: #{lgnn_layer.18} parent=0 // pred_region
    _
  $region29: #{lgnn_layer.18} parent=0 // pred_fallthru
    _
  // Predicated region
  $region30: #{lgnn_layer.18} parent=0 // pred_check
    _
  $region31: #{lgnn_layer.18} parent=0 // pred_check_branch
    %175 = sbr.rel (0) target = $region33
  $region32: #{lgnn_layer.18} parent=0 // pred_region
    _
  $region33: #{lgnn_layer.18} parent=0 // pred_fallthru
    _
  // Predicated region
  $region34: #{lgnn_layer.18} parent=0 // pred_check
    _
  $region35: #{lgnn_layer.18} parent=0 // pred_check_branch
    %177 = sbr.rel (0) target = $region37
  $region36: #{lgnn_layer.18} parent=0 // pred_region
    _
  $region37: #{lgnn_layer.18} parent=0 // pred_fallthru
    _
  // Predicated region
  $region38: #{lgnn_layer.18} parent=0 // pred_check
    _
  $region39: #{lgnn_layer.18} parent=0 // pred_check_branch
    %179 = sbr.rel (0) target = $region41
  $region40: #{lgnn_layer.18} parent=0 // pred_region
    _
  $region41: #{lgnn_layer.18} parent=0 // pred_fallthru
    _

// kernel: lgnn_layer.19
$region0: #{lgnn_layer.19}
  #allocation0 [shape = 'u32[]', space=smem, size = 0x4, offset = 0x4, fixed_abs, tag = 'smem constant byte address 0x4 - core index']
  #allocation1 [shape = 'u32[144,128]{1,0:T(1,128)}', space=vmem, size = 0x12000, scoped, tag = 'internal scratch']
  %s0 = inlined_call_operand.vmem [shape: f32[32,128], index: 0, kind: input, shape index: {}]
  %s1 = inlined_call_operand.vmem [shape: f32[1,128], index: 1, kind: input, shape index: {}]
  %s2 = inlined_call_operand.vmem [shape: f32[1,128], index: 2, kind: input, shape index: {}]
  %s3 = inlined_call_operand.vmem [shape: f32[1,128], index: 3, kind: input, shape index: {}]
  %s4 = inlined_call_operand.vmem [shape: f32[1,128], index: 4, kind: input, shape index: {}]
  %s5 = inlined_call_operand.vmem [shape: f32[32,128], index: 5, kind: output, shape index: {}]
  %s6 = sld [smem:[#allocation0]]
  $region30: #{lgnn_layer.19} parent=0
    _
  %s8 = ssub.s32 1, %s6
  %s9 = scalar_select 0, %s8, %s6
  // Predicated region
  $region2: #{lgnn_layer.19} parent=0 // pred_check
    _
  $region3: #{lgnn_layer.19} parent=0 // pred_check_branch
    %11 = sbr.rel (0) target = $region5
  $region4: #{lgnn_layer.19} parent=0 // pred_region
    _
  $region5: #{lgnn_layer.19} parent=0 // pred_fallthru
    _
  // Predicated region
  $region6: #{lgnn_layer.19} parent=0 // pred_check
    _
  $region7: #{lgnn_layer.19} parent=0 // pred_check_branch
    %13 = sbr.rel (0) target = $region9
  $region8: #{lgnn_layer.19} parent=0 // pred_region
    _
  $region9: #{lgnn_layer.19} parent=0 // pred_fallthru
    _
  // Predicated region
  $region10: #{lgnn_layer.19} parent=0 // pred_check
    _
  $region11: #{lgnn_layer.19} parent=0 // pred_check_branch
    %15 = sbr.rel (0) target = $region13
  $region12: #{lgnn_layer.19} parent=0 // pred_region
    _
  $region13: #{lgnn_layer.19} parent=0 // pred_fallthru
    _
  // Predicated region
  $region14: #{lgnn_layer.19} parent=0 // pred_check
    _
  $region15: #{lgnn_layer.19} parent=0 // pred_check_branch
    %17 = sbr.rel (0) target = $region17
  $region16: #{lgnn_layer.19} parent=0 // pred_region
    _
  $region17: #{lgnn_layer.19} parent=0 // pred_fallthru
    _
  // Predicated region
  $region18: #{lgnn_layer.19} parent=0 // pred_check
    _
  $region19: #{lgnn_layer.19} parent=0 // pred_check_branch
    %19 = sbr.rel (0) target = $region21
  $region20: #{lgnn_layer.19} parent=0 // pred_region
    _
  $region21: #{lgnn_layer.19} parent=0 // pred_fallthru
    _
  %v20 = vld [vmem:[%s1] sm:$0x1]
  %v21 = vmul.f32 %v20, 0.03125
  %v22 = vld [vmem:[%s2] sm:$0x1]
  %v23 = vmul.f32 %v22, 0.03125
  %v24 = vmul.f32 %v21, %v21
  %v25 = vsub.f32 %v23, %v24
  %v26 = vmax.f32 %v25, 0.0
  %v27 = vld [vmem:[%s0] sm:$0xff]
  %v28 = vld [vmem:[%s0 + $0x8] sm:$0xff]
  %v29 = vld [vmem:[%s0 + $0x10] sm:$0xff]
  %v30 = vld [vmem:[%s0 + $0x18] sm:$0xff]
  %v32 = vlaneseq
  %v33 = vshrl.u32 %v32, 7
  %v34 = vsub.s32 0, %v33
  %v35 = vrot.slane %v21, %v34
  %v37 = vsub.f32 %v27, %v35
  %v38 = vsub.f32 %v28, %v35
  %v39 = vsub.f32 %v29, %v35
  %v40 = vsub.f32 %v30, %v35
  %v41 = vadd.f32 %v26, 1e-05
  %v42 = vrsqrt.pop %v41
  %v44 = vlaneseq
  %v45 = vshrl.u32 %v44, 7
  %v46 = vsub.s32 0, %v45
  %v47 = vrot.slane %v42, %v46
  %v49 = vmul.f32 %v37, %v47
  %v50 = vmul.f32 %v38, %v47
  %v51 = vmul.f32 %v39, %v47
  %v52 = vmul.f32 %v40, %v47
  %v53 = vld [vmem:[%s3] sm:$0x1]
  %v55 = vlaneseq
  %v56 = vshrl.u32 %v55, 7
  %v57 = vsub.s32 0, %v56
  %v58 = vrot.slane %v53, %v57
  %v60 = vmul.f32 %v49, %v58
  %v61 = vmul.f32 %v50, %v58
  %v62 = vmul.f32 %v51, %v58
  %v63 = vmul.f32 %v52, %v58
  %v64 = vld [vmem:[%s4] sm:$0x1]
  %v66 = vlaneseq
  %v67 = vshrl.u32 %v66, 7
  %v68 = vsub.s32 0, %v67
  %v69 = vrot.slane %v64, %v68
  %v71 = vadd.f32 %v60, %v69
  %v72 = vadd.f32 %v61, %v69
  %v73 = vadd.f32 %v62, %v69
  %v74 = vadd.f32 %v63, %v69
  %75 = vst [vmem:[%s5] sm:$0xff] %v71
  %76 = vst [vmem:[%s5 + $0x8] sm:$0xff] %v72
  %77 = vst [vmem:[%s5 + $0x10] sm:$0xff] %v73
  %78 = vst [vmem:[%s5 + $0x18] sm:$0xff] %v74
  // Predicated region
  $region22: #{lgnn_layer.19} parent=0 // pred_check
    _
  $region23: #{lgnn_layer.19} parent=0 // pred_check_branch
    %80 = sbr.rel (0) target = $region25
  $region24: #{lgnn_layer.19} parent=0 // pred_region
    _
  $region25: #{lgnn_layer.19} parent=0 // pred_fallthru
    _
  // Predicated region
  $region26: #{lgnn_layer.19} parent=0 // pred_check
    _
  $region27: #{lgnn_layer.19} parent=0 // pred_check_branch
    %82 = sbr.rel (0) target = $region29
  $region28: #{lgnn_layer.19} parent=0 // pred_region
    _
  $region29: #{lgnn_layer.19} parent=0 // pred_fallthru
    _

</llo_original>
